<compile_context>
chip_gen: v6e
topology: v6e:2x2x1
jax: 0.10.0
libtpu: 0.0.40
codegen_flags: <defaults>
</compile_context>

<pallas_src>
import functools

import jax
import jax.numpy as jnp
from jax import lax
from jax.experimental import pallas as pl
from jax.experimental.pallas import tpu as pltpu

_F32 = jnp.float32
_BF16 = jnp.bfloat16


# ----------------------------------------------------------------------------
# helpers
# ----------------------------------------------------------------------------
def _pick_batch_block(n):
    """Batch block for the front kernel (must equal N or be a multiple of 8)."""
    if n % 8 != 0:
        return n
    for b in (32, 16, 8):
        if n % b == 0:
            return b
    return n


def _pick_time_block(t, cap=64):
    """Time chunk for the GRU kernel (must divide T)."""
    if t <= cap:
        return t // 2 if (t % 2 == 0 and t > 8) else t
    for tb in range(cap, 7, -1):
        if t % tb == 0:
            return tb
    return t


def _shift_time(a, steps, b_blk, t_len):
    """Shift a flattened time-major activation by `steps` time frames.

    a: (T*b_blk, C) with row = t*b_blk + b.  Returns r with r[t] = a[t - steps],
    zero outside [0, T).  Rolls run on the XLU slot, masks on the VPU.
    """
    m = a.shape[0]
    s = (steps * b_blk) % m
    r = a if s == 0 else pltpu.roll(a, shift=s, axis=0)
    row = lax.broadcasted_iota(jnp.int32, a.shape, 0)
    if steps > 0:
        return jnp.where(row < steps * b_blk, jnp.zeros_like(r), r)
    if steps < 0:
        return jnp.where(row >= (t_len + steps) * b_blk, jnp.zeros_like(r), r)
    return r


# ----------------------------------------------------------------------------
# Kernel 1: conv bank -> maxpool -> projections -> residual -> highway ->
#           GRU input projections (both directions).  grid = (N // B_blk,).
# ----------------------------------------------------------------------------
def _front_kernel(x_ref, wB_ref, sB_ref, bB_ref,
                  w1_ref, s1_ref, b1_ref,
                  w2_ref, s2_ref, b2_ref,
                  whw_ref, bhw_ref,
                  wih_ref, bih_ref,
                  gif_ref, gib_ref, *, n_highway, K, B, T):
    D = x_ref.shape[-1]
    Hd = s1_ref.shape[-1]
    M = T * B

    x = x_ref[...].astype(_F32).reshape(M, D)            # time-major, flattened

    # --- conv bank: im2col windows built in-kernel (K XLU rolls, no HBM blow-up) ---
    P = K // 2
    cols = [_shift_time(x, P - tau, B, T).astype(_BF16) for tau in range(K)]
    xi = jnp.concatenate(cols, axis=-1)                   # (M, K*D) bf16
    y = jnp.dot(xi, wB_ref[...], preferred_element_type=_F32)     # (M, K*Hd)
    y = jnp.maximum(y * sB_ref[...] + bB_ref[...], 0.0)           # folded BN + ReLU

    # --- MaxPool1d(2, stride=1, padding=1)[..., :-1]  ==  max(y[t-1], y[t]) ---
    yprev = pltpu.roll(y, shift=B, axis=0)
    row = lax.broadcasted_iota(jnp.int32, y.shape, 0)
    y = jnp.maximum(y, jnp.where(row < B, -jnp.inf, yprev))

    # --- projection conv 1 (k=3, 'same'): single MXU push over stacked taps ---
    y_cat = jnp.concatenate(
        [_shift_time(y, 1, B, T).astype(_BF16), y.astype(_BF16),
         _shift_time(y, -1, B, T).astype(_BF16)], axis=-1)        # (M, 3*K*Hd) bf16
    y1 = jnp.dot(y_cat, w1_ref[...], preferred_element_type=_F32)
    y1 = jnp.maximum(y1 * s1_ref[...] + b1_ref[...], 0.0)         # (M, Hd)

    # --- projection conv 2 (k=3, 'same'), BN, no activation ---
    y1_cat = jnp.concatenate(
        [_shift_time(y1, 1, B, T).astype(_BF16), y1.astype(_BF16),
         _shift_time(y1, -1, B, T).astype(_BF16)], axis=-1)       # (M, 3*Hd) bf16
    y2 = jnp.dot(y1_cat, w2_ref[...], preferred_element_type=_F32)
    y2 = y2 * s2_ref[...] + b2_ref[...]                           # (M, D)

    # --- residual ---
    y = y2 + x

    # --- highway stack: one fused (D, 2D) matmul per layer ([Wh | Wt]) ---
    for l in range(n_highway):
        z = jnp.dot(y.astype(_BF16), whw_ref[l],
                    preferred_element_type=_F32) + bhw_ref[l]     # (M, 2D)
        h = jnp.maximum(z[:, :D], 0.0)
        t = jax.nn.sigmoid(z[:, D:])
        y = h * t + y * (1.0 - t)

    # --- GRU input projections for both directions: one (D, 6H) matmul ---
    gi = jnp.dot(y.astype(_BF16), wih_ref[...],
                 preferred_element_type=_F32) + bih_ref[...]      # (M, 6H)
    gi = gi.reshape(T, B, 6 * Hd)
    gif_ref[...] = gi[:, :, :3 * Hd].astype(gif_ref.dtype)
    gib_ref[...] = gi[:, :, 3 * Hd:].astype(gib_ref.dtype)


def cbhg_front(x_t, params):
    """x_t: (T, N, D) time-major input.  Returns gi_f, gi_b: (T, N, 3H) bf16."""
    T, N, D = x_t.shape
    K, Hd, L = params["K"], params["hidden_dim"], params["n_highway"]
    B = _pick_batch_block(N)
    H3 = 3 * Hd

    kernel = functools.partial(_front_kernel, n_highway=L, K=K, B=B, T=T)
    gi_f, gi_b = pl.pallas_call(
        kernel,
        grid=(N // B,),
        in_specs=[
            pl.BlockSpec((T, B, D), lambda n: (0, n, 0)),          # x (f32)
            pl.BlockSpec((K * D, K * Hd), lambda n: (0, 0)),       # bank W (bf16)
            pl.BlockSpec((1, K * Hd), lambda n: (0, 0)),           # bank BN scale
            pl.BlockSpec((1, K * Hd), lambda n: (0, 0)),           # bank BN shift
            pl.BlockSpec((3 * K * Hd, Hd), lambda n: (0, 0)),      # proj1 W (bf16)
            pl.BlockSpec((1, Hd), lambda n: (0, 0)),
            pl.BlockSpec((1, Hd), lambda n: (0, 0)),
            pl.BlockSpec((3 * Hd, D), lambda n: (0, 0)),           # proj2 W (bf16)
            pl.BlockSpec((1, D), lambda n: (0, 0)),
            pl.BlockSpec((1, D), lambda n: (0, 0)),
            pl.BlockSpec((L, D, 2 * D), lambda n: (0, 0, 0)),      # highway [Wh|Wt] bf16
            pl.BlockSpec((L, 1, 2 * D), lambda n: (0, 0, 0)),      # highway [bh|bt] f32
            pl.BlockSpec((D, 6 * Hd), lambda n: (0, 0)),           # GRU Wih [fwd|bwd] bf16
            pl.BlockSpec((1, 6 * Hd), lambda n: (0, 0)),           # GRU bih f32
        ],
        out_specs=(
            pl.BlockSpec((T, B, H3), lambda n: (0, n, 0)),
            pl.BlockSpec((T, B, H3), lambda n: (0, n, 0)),
        ),
        out_shape=(jax.ShapeDtypeStruct((T, N, H3), _BF16),
                   jax.ShapeDtypeStruct((T, N, H3), _BF16)),
        compiler_params=pltpu.CompilerParams(
            dimension_semantics=("parallel",),
            vmem_limit_bytes=48 * 1024 * 1024),
    )(x_t,
      params["bank_w"], params["bank_scale"], params["bank_shift"],
      params["proj1_w"], params["proj1_scale"], params["proj1_shift"],
      params["proj2_w"], params["proj2_scale"], params["proj2_shift"],
      params["hw_w"], params["hw_b"],
      params["gru_wih"], params["gru_bih"])
    return gi_f, gi_b


# ----------------------------------------------------------------------------
# Kernel 2: bidirectional GRU recurrence, both directions interleaved per step,
# time-chunked grid (gi/y streamed through VMEM), h carried in VMEM scratch.
# ----------------------------------------------------------------------------
def _gru_kernel(gif_ref, gib_ref, h0_ref, whh_ref, bhh_ref,
                yf_ref, yb_ref, hT_ref, hf_scr, hb_scr, *, T_blk, H):
    c = pl.program_id(0)

    @pl.when(c == 0)
    def _():
        hf_scr[...] = h0_ref[0].astype(_F32)
        hb_scr[...] = h0_ref[1].astype(_F32)

    whh_f = whh_ref[0]                 # (H, 3H) bf16
    whh_b = whh_ref[1]
    bhh_f = bhh_ref[0]                 # (1, 3H) f32
    bhh_b = bhh_ref[1]

    def gate(gi, gh, h):
        r = jax.nn.sigmoid(gi[:, :H] + gh[:, :H])
        z = jax.nn.sigmoid(gi[:, H:2 * H] + gh[:, H:2 * H])
        n = jnp.tanh(gi[:, 2 * H:] + r * gh[:, 2 * H:])   # bhh_n inside r* (PyTorch)
        return (1.0 - z) * n + z * h

    def step(i, carry):
        h_f, h_b = carry
        # forward direction: local time i (global c*T_blk + i)
        gi_f = gif_ref[i].astype(_F32)
        gh_f = jnp.dot(h_f.astype(_BF16), whh_f, preferred_element_type=_F32) + bhh_f
        h_f = gate(gi_f, gh_f, h_f)
        yf_ref[i] = h_f.astype(yf_ref.dtype)
        # backward direction: local time T_blk-1-i of its reversed-order chunk
        j = T_blk - 1 - i
        gi_b = gib_ref[j].astype(_F32)
        gh_b = jnp.dot(h_b.astype(_BF16), whh_b, preferred_element_type=_F32) + bhh_b
        h_b = gate(gi_b, gh_b, h_b)
        yb_ref[j] = h_b.astype(yb_ref.dtype)
        return (h_f, h_b)

    h_f, h_b = lax.fori_loop(0, T_blk, step, (hf_scr[...], hb_scr[...]),
                             unroll=True if T_blk <= 16 else False)
    hf_scr[...] = h_f
    hb_scr[...] = h_b
    hT_ref[0] = h_f.astype(hT_ref.dtype)   # resident block; final flush is correct
    hT_ref[1] = h_b.astype(hT_ref.dtype)


def gru_bidirectional(gi_f, gi_b, h0, whh, bhh, out_dtype):
    T, N, H3 = gi_f.shape
    H = H3 // 3
    T_blk = _pick_time_block(T)
    C = T // T_blk

    kernel = functools.partial(_gru_kernel, T_blk=T_blk, H=H)
    y_f, y_b, hT = pl.pallas_call(
        kernel,
        grid=(C,),
        in_specs=[
            pl.BlockSpec((T_blk, N, H3), lambda c: (c, 0, 0)),          # gi fwd
            pl.BlockSpec((T_blk, N, H3), lambda c: (C - 1 - c, 0, 0)),  # gi bwd (rev chunks)
            pl.BlockSpec((2, N, H), lambda c: (0, 0, 0)),               # h0
            pl.BlockSpec((2, H, H3), lambda c: (0, 0, 0)),              # Whh (bf16)
            pl.BlockSpec((2, 1, H3), lambda c: (0, 0, 0)),              # bhh (f32)
        ],
        out_specs=(
            pl.BlockSpec((T_blk, N, H), lambda c: (c, 0, 0)),
            pl.BlockSpec((T_blk, N, H), lambda c: (C - 1 - c, 0, 0)),
            pl.BlockSpec((2, N, H), lambda c: (0, 0, 0)),
        ),
        out_shape=(jax.ShapeDtypeStruct((T, N, H), out_dtype),
                   jax.ShapeDtypeStruct((T, N, H), out_dtype),
                   jax.ShapeDtypeStruct((2, N, H), out_dtype)),
        scratch_shapes=[pltpu.VMEM((N, H), _F32),
                        pltpu.VMEM((N, H), _F32)],
        compiler_params=pltpu.CompilerParams(
            dimension_semantics=("arbitrary",),
            vmem_limit_bytes=48 * 1024 * 1024),
    )(gi_f, gi_b, h0, whh, bhh)
    return y_f, y_b, hT


# ----------------------------------------------------------------------------
# Full CBHG forward
# ----------------------------------------------------------------------------
def cbhg_forward(x, params, prev=None):
    """x: (N, Tx, input_dim) -> (y: (N, Tx, 2*hidden_dim), hidden: (2, N, hidden_dim))."""
    N, T, D = x.shape
    Hd = params["hidden_dim"]

    x_t = jnp.transpose(x, (1, 0, 2))                      # time-major (tiny tensor)
    gi_f, gi_b = cbhg_front(x_t, params)                   # (T, N, 3H) bf16, no XLA re-layout

    h0 = (jnp.zeros((2, N, Hd), _F32) if prev is None else prev.astype(_F32))
    y_f, y_b, hidden = gru_bidirectional(gi_f, gi_b, h0,
                                         params["gru_whh"], params["gru_bhh"],
                                         x.dtype)

    y = jnp.transpose(jnp.concatenate([y_f, y_b], axis=-1), (1, 0, 2))
    return y, hidden.astype(x.dtype)


# ----------------------------------------------------------------------------
# Deterministic parameter init (synthetic; shapes/packing follow the PyTorch module).
# ----------------------------------------------------------------------------
def init_params(key, input_dim, hidden_dim, K, n_highway):
    keys = iter(jax.random.split(key, 64))

    def nrm(shape, scale=0.1):
        return (scale * jax.random.normal(next(keys), shape)).astype(_F32)

    eps = 1e-5
    inv_std = jnp.float32(1.0 / float((1.0 + eps) ** 0.5))   # BN eval: mean=0, var=1
    Cin, Hd = input_dim, hidden_dim

    # Conv bank: kernel sizes 1..K zero-padded to a common tap length K, packed for
    # one im2col matmul: rows ordered (tap tau, in-channel c), cols (conv j, out h).
    w_bank = jnp.zeros((K, K, Cin, Hd), _F32)
    for j in range(K):
        k = j + 1
        off = K // 2 - k // 2
        w_bank = w_bank.at[j, off:off + k].set(nrm((k, Cin, Hd), 0.2))
    bank_w = w_bank.transpose(1, 2, 0, 3).reshape(K * Cin, K * Hd)
    bank_gamma = 1.0 + nrm((K, Hd), 0.1)
    bank_beta = nrm((K, Hd), 0.1)

    p1_w = nrm((3, K * Hd, Hd), 0.05).reshape(3 * K * Hd, Hd)   # taps stacked [prev|ctr|next]
    p1_gamma = 1.0 + nrm((Hd,), 0.1)
    p1_beta = nrm((Hd,), 0.1)
    p2_w = nrm((3, Hd, Cin), 0.1).reshape(3 * Hd, Cin)
    p2_gamma = 1.0 + nrm((Cin,), 0.1)
    p2_beta = nrm((Cin,), 0.1)

    hw_wh = nrm((n_highway, Cin, Cin), 0.3)
    hw_wt = nrm((n_highway, Cin, Cin), 0.3)
    hw_bh = nrm((n_highway, 1, Cin), 0.1)
    hw_bt = nrm((n_highway, 1, Cin), 0.1)
    hw_w = jnp.concatenate([hw_wh, hw_wt], axis=-1)             # (L, D, 2D) = [Wh | Wt]
    hw_b = jnp.concatenate([hw_bh, hw_bt], axis=-1)             # (L, 1, 2D)

    gru_wih_fb = nrm((2, Cin, 3 * Hd), 0.3)                     # [forward, backward]
    gru_wih = jnp.concatenate([gru_wih_fb[0], gru_wih_fb[1]], axis=-1)   # (D, 6H)
    gru_bih_fb = nrm((2, 1, 3 * Hd), 0.1)
    gru_bih = jnp.concatenate([gru_bih_fb[0], gru_bih_fb[1]], axis=-1)   # (1, 6H)
    gru_whh = nrm((2, Hd, 3 * Hd), 0.3)
    gru_bhh = nrm((2, 1, 3 * Hd), 0.1)

    return dict(
        K=K, hidden_dim=Hd, n_highway=n_highway,
        # matmul operands in bf16 (MXU), scales/shifts/biases in f32 (VPU path)
        bank_w=bank_w.astype(_BF16),
        bank_scale=(bank_gamma * inv_std).reshape(1, K * Hd),
        bank_shift=bank_beta.reshape(1, K * Hd),
        proj1_w=p1_w.astype(_BF16),
        proj1_scale=(p1_gamma * inv_std).reshape(1, Hd),
        proj1_shift=p1_beta.reshape(1, Hd),
        proj2_w=p2_w.astype(_BF16),
        proj2_scale=(p2_gamma * inv_std).reshape(1, Cin),
        proj2_shift=p2_beta.reshape(1, Cin),
        hw_w=hw_w.astype(_BF16), hw_b=hw_b,
        gru_wih=gru_wih.astype(_BF16), gru_bih=gru_bih,
        gru_whh=gru_whh.astype(_BF16), gru_bhh=gru_bhh,
    )


if __name__ == "__main__":
    N, T, input_dim, hidden_dim, K, n_highway = 2, 16, 8, 16, 16, 4
    kx, kp = jax.random.split(jax.random.PRNGKey(0))
    x = jax.random.normal(kx, (N, T, input_dim), _F32)
    params = init_params(kp, input_dim, hidden_dim, K, n_highway)

    y, hidden = cbhg_forward(x, params, prev=None)
    y, hidden = jax.block_until_ready((y, hidden))

    assert y.shape == (N, T, 2 * hidden_dim), y.shape
    assert hidden.shape == (2, N, hidden_dim), hidden.shape
    assert bool(jnp.all(jnp.isfinite(y))) and bool(jnp.all(jnp.isfinite(hidden)))
    print("KERNEL_OK")
</pallas_src>

<mosaic_0001>
module attributes {stable_mosaic.version = 11 : i64} {
  func.func @_front_kernel(%arg0: i32, %arg1: memref<16x2x8xf32, #tpu.memory_space<vmem>>, %arg2: memref<128x256xbf16, #tpu.memory_space<vmem>>, %arg3: memref<1x256xf32, #tpu.memory_space<vmem>>, %arg4: memref<1x256xf32, #tpu.memory_space<vmem>>, %arg5: memref<768x16xbf16, #tpu.memory_space<vmem>>, %arg6: memref<1x16xf32, #tpu.memory_space<vmem>>, %arg7: memref<1x16xf32, #tpu.memory_space<vmem>>, %arg8: memref<48x8xbf16, #tpu.memory_space<vmem>>, %arg9: memref<1x8xf32, #tpu.memory_space<vmem>>, %arg10: memref<1x8xf32, #tpu.memory_space<vmem>>, %arg11: memref<4x8x16xbf16, #tpu.memory_space<vmem>>, %arg12: memref<4x1x16xf32, #tpu.memory_space<vmem>>, %arg13: memref<8x96xbf16, #tpu.memory_space<vmem>>, %arg14: memref<1x96xf32, #tpu.memory_space<vmem>>, %arg15: memref<16x2x48xbf16, #tpu.memory_space<vmem>>, %arg16: memref<16x2x48xbf16, #tpu.memory_space<vmem>>) attributes {dimension_semantics = [#tpu.dimension_semantics<parallel>], iteration_bounds = array<i64: 1>, scalar_prefetch = 0 : i64, scratch_operands = 0 : i64, tpu.core_type = #tpu.core_type<tc>, window_params = [{transform_indices = @transform_0, window_bounds = array<i64: 16, 2, 8>}, {pipeline_mode = #tpu.pipeline_mode<synchronous>, transform_indices = @transform_1, window_bounds = array<i64: 128, 256>}, {pipeline_mode = #tpu.pipeline_mode<synchronous>, transform_indices = @transform_2, window_bounds = array<i64: 1, 256>}, {pipeline_mode = #tpu.pipeline_mode<synchronous>, transform_indices = @transform_3, window_bounds = array<i64: 1, 256>}, {pipeline_mode = #tpu.pipeline_mode<synchronous>, transform_indices = @transform_4, window_bounds = array<i64: 768, 16>}, {pipeline_mode = #tpu.pipeline_mode<synchronous>, transform_indices = @transform_5, window_bounds = array<i64: 1, 16>}, {pipeline_mode = #tpu.pipeline_mode<synchronous>, transform_indices = @transform_6, window_bounds = array<i64: 1, 16>}, {pipeline_mode = #tpu.pipeline_mode<synchronous>, transform_indices = @transform_7, window_bounds = array<i64: 48, 8>}, {pipeline_mode = #tpu.pipeline_mode<synchronous>, transform_indices = @transform_8, window_bounds = array<i64: 1, 8>}, {pipeline_mode = #tpu.pipeline_mode<synchronous>, transform_indices = @transform_9, window_bounds = array<i64: 1, 8>}, {pipeline_mode = #tpu.pipeline_mode<synchronous>, transform_indices = @transform_10, window_bounds = array<i64: 4, 8, 16>}, {pipeline_mode = #tpu.pipeline_mode<synchronous>, transform_indices = @transform_11, window_bounds = array<i64: 4, 1, 16>}, {pipeline_mode = #tpu.pipeline_mode<synchronous>, transform_indices = @transform_12, window_bounds = array<i64: 8, 96>}, {pipeline_mode = #tpu.pipeline_mode<synchronous>, transform_indices = @transform_13, window_bounds = array<i64: 1, 96>}, {transform_indices = @transform_14, window_bounds = array<i64: 16, 2, 48>}, {transform_indices = @transform_15, window_bounds = array<i64: 16, 2, 48>}]} {
    %c0 = arith.constant 0 : index
    %c0_0 = arith.constant 0 : index
    %c0_1 = arith.constant 0 : index
    %0 = vector.load %arg1[%c0, %c0_0, %c0_1] : memref<16x2x8xf32, #tpu.memory_space<vmem>>, vector<16x2x8xf32>
    %1 = vector.shape_cast %0 : vector<16x2x8xf32> to vector<32x8xf32>
    %c16_i32 = arith.constant 16 : i32
    %2 = tpu.dynamic_rotate %1 by %c16_i32 dim 0 : vector<32x8xf32>, i32 -> vector<32x8xf32>
    %3 = tpu.iota {dimensions = array<i32: 0>} : vector<32x8xi32>
    %c16_i32_2 = arith.constant 16 : i32
    %4 = vector.broadcast %c16_i32_2 : i32 to vector<32x8xi32>
    %5 = arith.cmpi slt, %3, %4 : vector<32x8xi32>
    %cst = arith.constant 0.000000e+00 : f32
    %6 = vector.broadcast %cst : f32 to vector<32x8xf32>
    %7 = arith.select %5, %6, %2 : vector<32x8xi1>, vector<32x8xf32>
    %8 = arith.truncf %7 : vector<32x8xf32> to vector<32x8xbf16>
    %c14_i32 = arith.constant 14 : i32
    %9 = tpu.dynamic_rotate %1 by %c14_i32 dim 0 : vector<32x8xf32>, i32 -> vector<32x8xf32>
    %10 = tpu.iota {dimensions = array<i32: 0>} : vector<32x8xi32>
    %c14_i32_3 = arith.constant 14 : i32
    %11 = vector.broadcast %c14_i32_3 : i32 to vector<32x8xi32>
    %12 = arith.cmpi slt, %10, %11 : vector<32x8xi32>
    %cst_4 = arith.constant 0.000000e+00 : f32
    %13 = vector.broadcast %cst_4 : f32 to vector<32x8xf32>
    %14 = arith.select %12, %13, %9 : vector<32x8xi1>, vector<32x8xf32>
    %15 = arith.truncf %14 : vector<32x8xf32> to vector<32x8xbf16>
    %c12_i32 = arith.constant 12 : i32
    %16 = tpu.dynamic_rotate %1 by %c12_i32 dim 0 : vector<32x8xf32>, i32 -> vector<32x8xf32>
    %17 = tpu.iota {dimensions = array<i32: 0>} : vector<32x8xi32>
    %c12_i32_5 = arith.constant 12 : i32
    %18 = vector.broadcast %c12_i32_5 : i32 to vector<32x8xi32>
    %19 = arith.cmpi slt, %17, %18 : vector<32x8xi32>
    %cst_6 = arith.constant 0.000000e+00 : f32
    %20 = vector.broadcast %cst_6 : f32 to vector<32x8xf32>
    %21 = arith.select %19, %20, %16 : vector<32x8xi1>, vector<32x8xf32>
    %22 = arith.truncf %21 : vector<32x8xf32> to vector<32x8xbf16>
    %c10_i32 = arith.constant 10 : i32
    %23 = tpu.dynamic_rotate %1 by %c10_i32 dim 0 : vector<32x8xf32>, i32 -> vector<32x8xf32>
    %24 = tpu.iota {dimensions = array<i32: 0>} : vector<32x8xi32>
    %c10_i32_7 = arith.constant 10 : i32
    %25 = vector.broadcast %c10_i32_7 : i32 to vector<32x8xi32>
    %26 = arith.cmpi slt, %24, %25 : vector<32x8xi32>
    %cst_8 = arith.constant 0.000000e+00 : f32
    %27 = vector.broadcast %cst_8 : f32 to vector<32x8xf32>
    %28 = arith.select %26, %27, %23 : vector<32x8xi1>, vector<32x8xf32>
    %29 = arith.truncf %28 : vector<32x8xf32> to vector<32x8xbf16>
    %c8_i32 = arith.constant 8 : i32
    %30 = tpu.dynamic_rotate %1 by %c8_i32 dim 0 : vector<32x8xf32>, i32 -> vector<32x8xf32>
    %31 = tpu.iota {dimensions = array<i32: 0>} : vector<32x8xi32>
    %c8_i32_9 = arith.constant 8 : i32
    %32 = vector.broadcast %c8_i32_9 : i32 to vector<32x8xi32>
    %33 = arith.cmpi slt, %31, %32 : vector<32x8xi32>
    %cst_10 = arith.constant 0.000000e+00 : f32
    %34 = vector.broadcast %cst_10 : f32 to vector<32x8xf32>
    %35 = arith.select %33, %34, %30 : vector<32x8xi1>, vector<32x8xf32>
    %36 = arith.truncf %35 : vector<32x8xf32> to vector<32x8xbf16>
    %c6_i32 = arith.constant 6 : i32
    %37 = tpu.dynamic_rotate %1 by %c6_i32 dim 0 : vector<32x8xf32>, i32 -> vector<32x8xf32>
    %38 = tpu.iota {dimensions = array<i32: 0>} : vector<32x8xi32>
    %c6_i32_11 = arith.constant 6 : i32
    %39 = vector.broadcast %c6_i32_11 : i32 to vector<32x8xi32>
    %40 = arith.cmpi slt, %38, %39 : vector<32x8xi32>
    %cst_12 = arith.constant 0.000000e+00 : f32
    %41 = vector.broadcast %cst_12 : f32 to vector<32x8xf32>
    %42 = arith.select %40, %41, %37 : vector<32x8xi1>, vector<32x8xf32>
    %43 = arith.truncf %42 : vector<32x8xf32> to vector<32x8xbf16>
    %c4_i32 = arith.constant 4 : i32
    %44 = tpu.dynamic_rotate %1 by %c4_i32 dim 0 : vector<32x8xf32>, i32 -> vector<32x8xf32>
    %45 = tpu.iota {dimensions = array<i32: 0>} : vector<32x8xi32>
    %c4_i32_13 = arith.constant 4 : i32
    %46 = vector.broadcast %c4_i32_13 : i32 to vector<32x8xi32>
    %47 = arith.cmpi slt, %45, %46 : vector<32x8xi32>
    %cst_14 = arith.constant 0.000000e+00 : f32
    %48 = vector.broadcast %cst_14 : f32 to vector<32x8xf32>
    %49 = arith.select %47, %48, %44 : vector<32x8xi1>, vector<32x8xf32>
    %50 = arith.truncf %49 : vector<32x8xf32> to vector<32x8xbf16>
    %c2_i32 = arith.constant 2 : i32
    %51 = tpu.dynamic_rotate %1 by %c2_i32 dim 0 : vector<32x8xf32>, i32 -> vector<32x8xf32>
    %52 = tpu.iota {dimensions = array<i32: 0>} : vector<32x8xi32>
    %c2_i32_15 = arith.constant 2 : i32
    %53 = vector.broadcast %c2_i32_15 : i32 to vector<32x8xi32>
    %54 = arith.cmpi slt, %52, %53 : vector<32x8xi32>
    %cst_16 = arith.constant 0.000000e+00 : f32
    %55 = vector.broadcast %cst_16 : f32 to vector<32x8xf32>
    %56 = arith.select %54, %55, %51 : vector<32x8xi1>, vector<32x8xf32>
    %57 = arith.truncf %56 : vector<32x8xf32> to vector<32x8xbf16>
    %58 = arith.truncf %1 : vector<32x8xf32> to vector<32x8xbf16>
    %c30_i32 = arith.constant 30 : i32
    %59 = tpu.dynamic_rotate %1 by %c30_i32 dim 0 : vector<32x8xf32>, i32 -> vector<32x8xf32>
    %60 = tpu.iota {dimensions = array<i32: 0>} : vector<32x8xi32>
    %c30_i32_17 = arith.constant 30 : i32
    %61 = vector.broadcast %c30_i32_17 : i32 to vector<32x8xi32>
    %62 = arith.cmpi sge, %60, %61 : vector<32x8xi32>
    %cst_18 = arith.constant 0.000000e+00 : f32
    %63 = vector.broadcast %cst_18 : f32 to vector<32x8xf32>
    %64 = arith.select %62, %63, %59 : vector<32x8xi1>, vector<32x8xf32>
    %65 = arith.truncf %64 : vector<32x8xf32> to vector<32x8xbf16>
    %c28_i32 = arith.constant 28 : i32
    %66 = tpu.dynamic_rotate %1 by %c28_i32 dim 0 : vector<32x8xf32>, i32 -> vector<32x8xf32>
    %67 = tpu.iota {dimensions = array<i32: 0>} : vector<32x8xi32>
    %c28_i32_19 = arith.constant 28 : i32
    %68 = vector.broadcast %c28_i32_19 : i32 to vector<32x8xi32>
    %69 = arith.cmpi sge, %67, %68 : vector<32x8xi32>
    %cst_20 = arith.constant 0.000000e+00 : f32
    %70 = vector.broadcast %cst_20 : f32 to vector<32x8xf32>
    %71 = arith.select %69, %70, %66 : vector<32x8xi1>, vector<32x8xf32>
    %72 = arith.truncf %71 : vector<32x8xf32> to vector<32x8xbf16>
    %c26_i32 = arith.constant 26 : i32
    %73 = tpu.dynamic_rotate %1 by %c26_i32 dim 0 : vector<32x8xf32>, i32 -> vector<32x8xf32>
    %74 = tpu.iota {dimensions = array<i32: 0>} : vector<32x8xi32>
    %c26_i32_21 = arith.constant 26 : i32
    %75 = vector.broadcast %c26_i32_21 : i32 to vector<32x8xi32>
    %76 = arith.cmpi sge, %74, %75 : vector<32x8xi32>
    %cst_22 = arith.constant 0.000000e+00 : f32
    %77 = vector.broadcast %cst_22 : f32 to vector<32x8xf32>
    %78 = arith.select %76, %77, %73 : vector<32x8xi1>, vector<32x8xf32>
    %79 = arith.truncf %78 : vector<32x8xf32> to vector<32x8xbf16>
    %c24_i32 = arith.constant 24 : i32
    %80 = tpu.dynamic_rotate %1 by %c24_i32 dim 0 : vector<32x8xf32>, i32 -> vector<32x8xf32>
    %81 = tpu.iota {dimensions = array<i32: 0>} : vector<32x8xi32>
    %c24_i32_23 = arith.constant 24 : i32
    %82 = vector.broadcast %c24_i32_23 : i32 to vector<32x8xi32>
    %83 = arith.cmpi sge, %81, %82 : vector<32x8xi32>
    %cst_24 = arith.constant 0.000000e+00 : f32
    %84 = vector.broadcast %cst_24 : f32 to vector<32x8xf32>
    %85 = arith.select %83, %84, %80 : vector<32x8xi1>, vector<32x8xf32>
    %86 = arith.truncf %85 : vector<32x8xf32> to vector<32x8xbf16>
    %c22_i32 = arith.constant 22 : i32
    %87 = tpu.dynamic_rotate %1 by %c22_i32 dim 0 : vector<32x8xf32>, i32 -> vector<32x8xf32>
    %88 = tpu.iota {dimensions = array<i32: 0>} : vector<32x8xi32>
    %c22_i32_25 = arith.constant 22 : i32
    %89 = vector.broadcast %c22_i32_25 : i32 to vector<32x8xi32>
    %90 = arith.cmpi sge, %88, %89 : vector<32x8xi32>
    %cst_26 = arith.constant 0.000000e+00 : f32
    %91 = vector.broadcast %cst_26 : f32 to vector<32x8xf32>
    %92 = arith.select %90, %91, %87 : vector<32x8xi1>, vector<32x8xf32>
    %93 = arith.truncf %92 : vector<32x8xf32> to vector<32x8xbf16>
    %c20_i32 = arith.constant 20 : i32
    %94 = tpu.dynamic_rotate %1 by %c20_i32 dim 0 : vector<32x8xf32>, i32 -> vector<32x8xf32>
    %95 = tpu.iota {dimensions = array<i32: 0>} : vector<32x8xi32>
    %c20_i32_27 = arith.constant 20 : i32
    %96 = vector.broadcast %c20_i32_27 : i32 to vector<32x8xi32>
    %97 = arith.cmpi sge, %95, %96 : vector<32x8xi32>
    %cst_28 = arith.constant 0.000000e+00 : f32
    %98 = vector.broadcast %cst_28 : f32 to vector<32x8xf32>
    %99 = arith.select %97, %98, %94 : vector<32x8xi1>, vector<32x8xf32>
    %100 = arith.truncf %99 : vector<32x8xf32> to vector<32x8xbf16>
    %c18_i32 = arith.constant 18 : i32
    %101 = tpu.dynamic_rotate %1 by %c18_i32 dim 0 : vector<32x8xf32>, i32 -> vector<32x8xf32>
    %102 = tpu.iota {dimensions = array<i32: 0>} : vector<32x8xi32>
    %c18_i32_29 = arith.constant 18 : i32
    %103 = vector.broadcast %c18_i32_29 : i32 to vector<32x8xi32>
    %104 = arith.cmpi sge, %102, %103 : vector<32x8xi32>
    %cst_30 = arith.constant 0.000000e+00 : f32
    %105 = vector.broadcast %cst_30 : f32 to vector<32x8xf32>
    %106 = arith.select %104, %105, %101 : vector<32x8xi1>, vector<32x8xf32>
    %107 = arith.truncf %106 : vector<32x8xf32> to vector<32x8xbf16>
    %108 = tpu.concatenate %8, %15, %22, %29, %36, %43, %50, %57, %58, %65, %72, %79, %86, %93, %100, %107 in 1 : vector<32x8xbf16>, vector<32x8xbf16>, vector<32x8xbf16>, vector<32x8xbf16>, vector<32x8xbf16>, vector<32x8xbf16>, vector<32x8xbf16>, vector<32x8xbf16>, vector<32x8xbf16>, vector<32x8xbf16>, vector<32x8xbf16>, vector<32x8xbf16>, vector<32x8xbf16>, vector<32x8xbf16>, vector<32x8xbf16>, vector<32x8xbf16> -> vector<32x128xbf16>
    %c0_31 = arith.constant 0 : index
    %c0_32 = arith.constant 0 : index
    %109 = vector.load %arg2[%c0_31, %c0_32] : memref<128x256xbf16, #tpu.memory_space<vmem>>, vector<128x256xbf16>
    %cst_33 = arith.constant dense<0.000000e+00> : vector<32x256xf32>
    %110 = tpu.matmul %108, %109, %cst_33 {dimension_numbers = #tpu.dot_dimension_numbers<[1], [0], [0], [1], [0, 0, 1, 1], [], []>} : vector<32x128xbf16>, vector<128x256xbf16>, vector<32x256xf32> -> vector<32x256xf32>
    %c0_34 = arith.constant 0 : index
    %c0_35 = arith.constant 0 : index
    %111 = vector.load %arg3[%c0_34, %c0_35] : memref<1x256xf32, #tpu.memory_space<vmem>>, vector<1x256xf32>
    %112 = vector.broadcast %111 : vector<1x256xf32> to vector<32x256xf32>
    %113 = arith.mulf %110, %112 : vector<32x256xf32>
    %c0_36 = arith.constant 0 : index
    %c0_37 = arith.constant 0 : index
    %114 = vector.load %arg4[%c0_36, %c0_37] : memref<1x256xf32, #tpu.memory_space<vmem>>, vector<1x256xf32>
    %115 = vector.broadcast %114 : vector<1x256xf32> to vector<32x256xf32>
    %116 = arith.addf %113, %115 : vector<32x256xf32>
    %cst_38 = arith.constant 0.000000e+00 : f32
    %117 = vector.broadcast %cst_38 : f32 to vector<32x256xf32>
    %118 = arith.maximumf %116, %117 : vector<32x256xf32>
    %c2_i32_39 = arith.constant 2 : i32
    %119 = tpu.dynamic_rotate %118 by %c2_i32_39 dim 0 : vector<32x256xf32>, i32 -> vector<32x256xf32>
    %120 = tpu.iota {dimensions = array<i32: 0>} : vector<32x256xi32>
    %c2_i32_40 = arith.constant 2 : i32
    %121 = vector.broadcast %c2_i32_40 : i32 to vector<32x256xi32>
    %122 = arith.cmpi slt, %120, %121 : vector<32x256xi32>
    %cst_41 = arith.constant 0xFF800000 : f32
    %123 = vector.broadcast %cst_41 : f32 to vector<32x256xf32>
    %124 = arith.select %122, %123, %119 : vector<32x256xi1>, vector<32x256xf32>
    %125 = arith.maximumf %118, %124 : vector<32x256xf32>
    %c2_i32_42 = arith.constant 2 : i32
    %126 = tpu.dynamic_rotate %125 by %c2_i32_42 dim 0 : vector<32x256xf32>, i32 -> vector<32x256xf32>
    %127 = tpu.iota {dimensions = array<i32: 0>} : vector<32x256xi32>
    %c2_i32_43 = arith.constant 2 : i32
    %128 = vector.broadcast %c2_i32_43 : i32 to vector<32x256xi32>
    %129 = arith.cmpi slt, %127, %128 : vector<32x256xi32>
    %cst_44 = arith.constant 0.000000e+00 : f32
    %130 = vector.broadcast %cst_44 : f32 to vector<32x256xf32>
    %131 = arith.select %129, %130, %126 : vector<32x256xi1>, vector<32x256xf32>
    %132 = arith.truncf %131 : vector<32x256xf32> to vector<32x256xbf16>
    %133 = arith.truncf %125 : vector<32x256xf32> to vector<32x256xbf16>
    %c30_i32_45 = arith.constant 30 : i32
    %134 = tpu.dynamic_rotate %125 by %c30_i32_45 dim 0 : vector<32x256xf32>, i32 -> vector<32x256xf32>
    %135 = tpu.iota {dimensions = array<i32: 0>} : vector<32x256xi32>
    %c30_i32_46 = arith.constant 30 : i32
    %136 = vector.broadcast %c30_i32_46 : i32 to vector<32x256xi32>
    %137 = arith.cmpi sge, %135, %136 : vector<32x256xi32>
    %cst_47 = arith.constant 0.000000e+00 : f32
    %138 = vector.broadcast %cst_47 : f32 to vector<32x256xf32>
    %139 = arith.select %137, %138, %134 : vector<32x256xi1>, vector<32x256xf32>
    %140 = arith.truncf %139 : vector<32x256xf32> to vector<32x256xbf16>
    %141 = tpu.concatenate %132, %133, %140 in 1 : vector<32x256xbf16>, vector<32x256xbf16>, vector<32x256xbf16> -> vector<32x768xbf16>
    %c0_48 = arith.constant 0 : index
    %c0_49 = arith.constant 0 : index
    %142 = vector.load %arg5[%c0_48, %c0_49] : memref<768x16xbf16, #tpu.memory_space<vmem>>, vector<768x16xbf16>
    %cst_50 = arith.constant dense<0.000000e+00> : vector<32x16xf32>
    %143 = tpu.matmul %141, %142, %cst_50 {dimension_numbers = #tpu.dot_dimension_numbers<[1], [0], [0], [1], [0, 0, 1, 1], [], []>} : vector<32x768xbf16>, vector<768x16xbf16>, vector<32x16xf32> -> vector<32x16xf32>
    %c0_51 = arith.constant 0 : index
    %c0_52 = arith.constant 0 : index
    %144 = vector.load %arg6[%c0_51, %c0_52] : memref<1x16xf32, #tpu.memory_space<vmem>>, vector<1x16xf32>
    %145 = vector.broadcast %144 : vector<1x16xf32> to vector<32x16xf32>
    %146 = arith.mulf %143, %145 : vector<32x16xf32>
    %c0_53 = arith.constant 0 : index
    %c0_54 = arith.constant 0 : index
    %147 = vector.load %arg7[%c0_53, %c0_54] : memref<1x16xf32, #tpu.memory_space<vmem>>, vector<1x16xf32>
    %148 = vector.broadcast %147 : vector<1x16xf32> to vector<32x16xf32>
    %149 = arith.addf %146, %148 : vector<32x16xf32>
    %cst_55 = arith.constant 0.000000e+00 : f32
    %150 = vector.broadcast %cst_55 : f32 to vector<32x16xf32>
    %151 = arith.maximumf %149, %150 : vector<32x16xf32>
    %c2_i32_56 = arith.constant 2 : i32
    %152 = tpu.dynamic_rotate %151 by %c2_i32_56 dim 0 : vector<32x16xf32>, i32 -> vector<32x16xf32>
    %153 = tpu.iota {dimensions = array<i32: 0>} : vector<32x16xi32>
    %c2_i32_57 = arith.constant 2 : i32
    %154 = vector.broadcast %c2_i32_57 : i32 to vector<32x16xi32>
    %155 = arith.cmpi slt, %153, %154 : vector<32x16xi32>
    %cst_58 = arith.constant 0.000000e+00 : f32
    %156 = vector.broadcast %cst_58 : f32 to vector<32x16xf32>
    %157 = arith.select %155, %156, %152 : vector<32x16xi1>, vector<32x16xf32>
    %158 = arith.truncf %157 : vector<32x16xf32> to vector<32x16xbf16>
    %159 = arith.truncf %151 : vector<32x16xf32> to vector<32x16xbf16>
    %c30_i32_59 = arith.constant 30 : i32
    %160 = tpu.dynamic_rotate %151 by %c30_i32_59 dim 0 : vector<32x16xf32>, i32 -> vector<32x16xf32>
    %161 = tpu.iota {dimensions = array<i32: 0>} : vector<32x16xi32>
    %c30_i32_60 = arith.constant 30 : i32
    %162 = vector.broadcast %c30_i32_60 : i32 to vector<32x16xi32>
    %163 = arith.cmpi sge, %161, %162 : vector<32x16xi32>
    %cst_61 = arith.constant 0.000000e+00 : f32
    %164 = vector.broadcast %cst_61 : f32 to vector<32x16xf32>
    %165 = arith.select %163, %164, %160 : vector<32x16xi1>, vector<32x16xf32>
    %166 = arith.truncf %165 : vector<32x16xf32> to vector<32x16xbf16>
    %167 = tpu.concatenate %158, %159, %166 in 1 : vector<32x16xbf16>, vector<32x16xbf16>, vector<32x16xbf16> -> vector<32x48xbf16>
    %c0_62 = arith.constant 0 : index
    %c0_63 = arith.constant 0 : index
    %168 = vector.load %arg8[%c0_62, %c0_63] : memref<48x8xbf16, #tpu.memory_space<vmem>>, vector<48x8xbf16>
    %cst_64 = arith.constant dense<0.000000e+00> : vector<32x8xf32>
    %169 = tpu.matmul %167, %168, %cst_64 {dimension_numbers = #tpu.dot_dimension_numbers<[1], [0], [0], [1], [0, 0, 1, 1], [], []>} : vector<32x48xbf16>, vector<48x8xbf16>, vector<32x8xf32> -> vector<32x8xf32>
    %c0_65 = arith.constant 0 : index
    %c0_66 = arith.constant 0 : index
    %170 = vector.load %arg9[%c0_65, %c0_66] : memref<1x8xf32, #tpu.memory_space<vmem>>, vector<1x8xf32>
    %171 = vector.broadcast %170 : vector<1x8xf32> to vector<32x8xf32>
    %172 = arith.mulf %169, %171 : vector<32x8xf32>
    %c0_67 = arith.constant 0 : index
    %c0_68 = arith.constant 0 : index
    %173 = vector.load %arg10[%c0_67, %c0_68] : memref<1x8xf32, #tpu.memory_space<vmem>>, vector<1x8xf32>
    %174 = vector.broadcast %173 : vector<1x8xf32> to vector<32x8xf32>
    %175 = arith.addf %172, %174 : vector<32x8xf32>
    %176 = arith.addf %175, %1 : vector<32x8xf32>
    %177 = arith.truncf %176 : vector<32x8xf32> to vector<32x8xbf16>
    %c0_69 = arith.constant 0 : index
    %c0_70 = arith.constant 0 : index
    %c0_71 = arith.constant 0 : index
    %178 = vector.load %arg11[%c0_69, %c0_70, %c0_71] : memref<4x8x16xbf16, #tpu.memory_space<vmem>>, vector<1x8x16xbf16>
    %179 = vector.shape_cast %178 : vector<1x8x16xbf16> to vector<8x16xbf16>
    %cst_72 = arith.constant dense<0.000000e+00> : vector<32x16xf32>
    %180 = tpu.matmul %177, %179, %cst_72 {dimension_numbers = #tpu.dot_dimension_numbers<[1], [0], [0], [1], [0, 0, 1, 1], [], []>} : vector<32x8xbf16>, vector<8x16xbf16>, vector<32x16xf32> -> vector<32x16xf32>
    %c0_73 = arith.constant 0 : index
    %c0_74 = arith.constant 0 : index
    %c0_75 = arith.constant 0 : index
    %181 = vector.load %arg12[%c0_73, %c0_74, %c0_75] : memref<4x1x16xf32, #tpu.memory_space<vmem>>, vector<1x1x16xf32>
    %182 = vector.shape_cast %181 : vector<1x1x16xf32> to vector<1x16xf32>
    %183 = vector.broadcast %182 : vector<1x16xf32> to vector<32x16xf32>
    %184 = arith.addf %180, %183 : vector<32x16xf32>
    %185 = vector.extract_strided_slice %184 {offsets = [0, 0], sizes = [32, 8], strides = [1, 1]} : vector<32x16xf32> to vector<32x8xf32>
    %cst_76 = arith.constant 0.000000e+00 : f32
    %186 = vector.broadcast %cst_76 : f32 to vector<32x8xf32>
    %187 = arith.maximumf %185, %186 : vector<32x8xf32>
    %188 = vector.extract_strided_slice %184 {offsets = [0, 8], sizes = [32, 8], strides = [1, 1]} : vector<32x16xf32> to vector<32x8xf32>
    %189 = arith.negf %188 : vector<32x8xf32>
    %190 = math.exp %189 : vector<32x8xf32>
    %cst_77 = arith.constant 1.000000e+00 : f32
    %191 = vector.broadcast %cst_77 : f32 to vector<32x8xf32>
    %192 = arith.addf %191, %190 : vector<32x8xf32>
    %193 = arith.divf %191, %192 : vector<32x8xf32>
    %194 = arith.mulf %187, %193 : vector<32x8xf32>
    %cst_78 = arith.constant 1.000000e+00 : f32
    %195 = vector.broadcast %cst_78 : f32 to vector<32x8xf32>
    %196 = arith.subf %195, %193 : vector<32x8xf32>
    %197 = arith.mulf %176, %196 : vector<32x8xf32>
    %198 = arith.addf %194, %197 : vector<32x8xf32>
    %199 = arith.truncf %198 : vector<32x8xf32> to vector<32x8xbf16>
    %c1 = arith.constant 1 : index
    %c0_79 = arith.constant 0 : index
    %c0_80 = arith.constant 0 : index
    %200 = vector.load %arg11[%c1, %c0_79, %c0_80] : memref<4x8x16xbf16, #tpu.memory_space<vmem>>, vector<1x8x16xbf16>
    %201 = vector.shape_cast %200 : vector<1x8x16xbf16> to vector<8x16xbf16>
    %cst_81 = arith.constant dense<0.000000e+00> : vector<32x16xf32>
    %202 = tpu.matmul %199, %201, %cst_81 {dimension_numbers = #tpu.dot_dimension_numbers<[1], [0], [0], [1], [0, 0, 1, 1], [], []>} : vector<32x8xbf16>, vector<8x16xbf16>, vector<32x16xf32> -> vector<32x16xf32>
    %c1_82 = arith.constant 1 : index
    %c0_83 = arith.constant 0 : index
    %c0_84 = arith.constant 0 : index
    %203 = vector.load %arg12[%c1_82, %c0_83, %c0_84] : memref<4x1x16xf32, #tpu.memory_space<vmem>>, vector<1x1x16xf32>
    %204 = vector.shape_cast %203 : vector<1x1x16xf32> to vector<1x16xf32>
    %205 = vector.broadcast %204 : vector<1x16xf32> to vector<32x16xf32>
    %206 = arith.addf %202, %205 : vector<32x16xf32>
    %207 = vector.extract_strided_slice %206 {offsets = [0, 0], sizes = [32, 8], strides = [1, 1]} : vector<32x16xf32> to vector<32x8xf32>
    %cst_85 = arith.constant 0.000000e+00 : f32
    %208 = vector.broadcast %cst_85 : f32 to vector<32x8xf32>
    %209 = arith.maximumf %207, %208 : vector<32x8xf32>
    %210 = vector.extract_strided_slice %206 {offsets = [0, 8], sizes = [32, 8], strides = [1, 1]} : vector<32x16xf32> to vector<32x8xf32>
    %211 = arith.negf %210 : vector<32x8xf32>
    %212 = math.exp %211 : vector<32x8xf32>
    %cst_86 = arith.constant 1.000000e+00 : f32
    %213 = vector.broadcast %cst_86 : f32 to vector<32x8xf32>
    %214 = arith.addf %213, %212 : vector<32x8xf32>
    %215 = arith.divf %213, %214 : vector<32x8xf32>
    %216 = arith.mulf %209, %215 : vector<32x8xf32>
    %cst_87 = arith.constant 1.000000e+00 : f32
    %217 = vector.broadcast %cst_87 : f32 to vector<32x8xf32>
    %218 = arith.subf %217, %215 : vector<32x8xf32>
    %219 = arith.mulf %198, %218 : vector<32x8xf32>
    %220 = arith.addf %216, %219 : vector<32x8xf32>
    %221 = arith.truncf %220 : vector<32x8xf32> to vector<32x8xbf16>
    %c2 = arith.constant 2 : index
    %c0_88 = arith.constant 0 : index
    %c0_89 = arith.constant 0 : index
    %222 = vector.load %arg11[%c2, %c0_88, %c0_89] : memref<4x8x16xbf16, #tpu.memory_space<vmem>>, vector<1x8x16xbf16>
    %223 = vector.shape_cast %222 : vector<1x8x16xbf16> to vector<8x16xbf16>
    %cst_90 = arith.constant dense<0.000000e+00> : vector<32x16xf32>
    %224 = tpu.matmul %221, %223, %cst_90 {dimension_numbers = #tpu.dot_dimension_numbers<[1], [0], [0], [1], [0, 0, 1, 1], [], []>} : vector<32x8xbf16>, vector<8x16xbf16>, vector<32x16xf32> -> vector<32x16xf32>
    %c2_91 = arith.constant 2 : index
    %c0_92 = arith.constant 0 : index
    %c0_93 = arith.constant 0 : index
    %225 = vector.load %arg12[%c2_91, %c0_92, %c0_93] : memref<4x1x16xf32, #tpu.memory_space<vmem>>, vector<1x1x16xf32>
    %226 = vector.shape_cast %225 : vector<1x1x16xf32> to vector<1x16xf32>
    %227 = vector.broadcast %226 : vector<1x16xf32> to vector<32x16xf32>
    %228 = arith.addf %224, %227 : vector<32x16xf32>
    %229 = vector.extract_strided_slice %228 {offsets = [0, 0], sizes = [32, 8], strides = [1, 1]} : vector<32x16xf32> to vector<32x8xf32>
    %cst_94 = arith.constant 0.000000e+00 : f32
    %230 = vector.broadcast %cst_94 : f32 to vector<32x8xf32>
    %231 = arith.maximumf %229, %230 : vector<32x8xf32>
    %232 = vector.extract_strided_slice %228 {offsets = [0, 8], sizes = [32, 8], strides = [1, 1]} : vector<32x16xf32> to vector<32x8xf32>
    %233 = arith.negf %232 : vector<32x8xf32>
    %234 = math.exp %233 : vector<32x8xf32>
    %cst_95 = arith.constant 1.000000e+00 : f32
    %235 = vector.broadcast %cst_95 : f32 to vector<32x8xf32>
    %236 = arith.addf %235, %234 : vector<32x8xf32>
    %237 = arith.divf %235, %236 : vector<32x8xf32>
    %238 = arith.mulf %231, %237 : vector<32x8xf32>
    %cst_96 = arith.constant 1.000000e+00 : f32
    %239 = vector.broadcast %cst_96 : f32 to vector<32x8xf32>
    %240 = arith.subf %239, %237 : vector<32x8xf32>
    %241 = arith.mulf %220, %240 : vector<32x8xf32>
    %242 = arith.addf %238, %241 : vector<32x8xf32>
    %243 = arith.truncf %242 : vector<32x8xf32> to vector<32x8xbf16>
    %c3 = arith.constant 3 : index
    %c0_97 = arith.constant 0 : index
    %c0_98 = arith.constant 0 : index
    %244 = vector.load %arg11[%c3, %c0_97, %c0_98] : memref<4x8x16xbf16, #tpu.memory_space<vmem>>, vector<1x8x16xbf16>
    %245 = vector.shape_cast %244 : vector<1x8x16xbf16> to vector<8x16xbf16>
    %cst_99 = arith.constant dense<0.000000e+00> : vector<32x16xf32>
    %246 = tpu.matmul %243, %245, %cst_99 {dimension_numbers = #tpu.dot_dimension_numbers<[1], [0], [0], [1], [0, 0, 1, 1], [], []>} : vector<32x8xbf16>, vector<8x16xbf16>, vector<32x16xf32> -> vector<32x16xf32>
    %c3_100 = arith.constant 3 : index
    %c0_101 = arith.constant 0 : index
    %c0_102 = arith.constant 0 : index
    %247 = vector.load %arg12[%c3_100, %c0_101, %c0_102] : memref<4x1x16xf32, #tpu.memory_space<vmem>>, vector<1x1x16xf32>
    %248 = vector.shape_cast %247 : vector<1x1x16xf32> to vector<1x16xf32>
    %249 = vector.broadcast %248 : vector<1x16xf32> to vector<32x16xf32>
    %250 = arith.addf %246, %249 : vector<32x16xf32>
    %251 = vector.extract_strided_slice %250 {offsets = [0, 0], sizes = [32, 8], strides = [1, 1]} : vector<32x16xf32> to vector<32x8xf32>
    %cst_103 = arith.constant 0.000000e+00 : f32
    %252 = vector.broadcast %cst_103 : f32 to vector<32x8xf32>
    %253 = arith.maximumf %251, %252 : vector<32x8xf32>
    %254 = vector.extract_strided_slice %250 {offsets = [0, 8], sizes = [32, 8], strides = [1, 1]} : vector<32x16xf32> to vector<32x8xf32>
    %255 = arith.negf %254 : vector<32x8xf32>
    %256 = math.exp %255 : vector<32x8xf32>
    %cst_104 = arith.constant 1.000000e+00 : f32
    %257 = vector.broadcast %cst_104 : f32 to vector<32x8xf32>
    %258 = arith.addf %257, %256 : vector<32x8xf32>
    %259 = arith.divf %257, %258 : vector<32x8xf32>
    %260 = arith.mulf %253, %259 : vector<32x8xf32>
    %cst_105 = arith.constant 1.000000e+00 : f32
    %261 = vector.broadcast %cst_105 : f32 to vector<32x8xf32>
    %262 = arith.subf %261, %259 : vector<32x8xf32>
    %263 = arith.mulf %242, %262 : vector<32x8xf32>
    %264 = arith.addf %260, %263 : vector<32x8xf32>
    %265 = arith.truncf %264 : vector<32x8xf32> to vector<32x8xbf16>
    %c0_106 = arith.constant 0 : index
    %c0_107 = arith.constant 0 : index
    %266 = vector.load %arg13[%c0_106, %c0_107] : memref<8x96xbf16, #tpu.memory_space<vmem>>, vector<8x96xbf16>
    %cst_108 = arith.constant dense<0.000000e+00> : vector<32x96xf32>
    %267 = tpu.matmul %265, %266, %cst_108 {dimension_numbers = #tpu.dot_dimension_numbers<[1], [0], [0], [1], [0, 0, 1, 1], [], []>} : vector<32x8xbf16>, vector<8x96xbf16>, vector<32x96xf32> -> vector<32x96xf32>
    %c0_109 = arith.constant 0 : index
    %c0_110 = arith.constant 0 : index
    %268 = vector.load %arg14[%c0_109, %c0_110] : memref<1x96xf32, #tpu.memory_space<vmem>>, vector<1x96xf32>
    %269 = vector.broadcast %268 : vector<1x96xf32> to vector<32x96xf32>
    %270 = arith.addf %267, %269 : vector<32x96xf32>
    %271 = vector.shape_cast %270 : vector<32x96xf32> to vector<16x2x96xf32>
    %272 = vector.extract_strided_slice %271 {offsets = [0, 0, 0], sizes = [16, 2, 48], strides = [1, 1, 1]} : vector<16x2x96xf32> to vector<16x2x48xf32>
    %273 = arith.truncf %272 : vector<16x2x48xf32> to vector<16x2x48xbf16>
    %c0_111 = arith.constant 0 : index
    %c0_112 = arith.constant 0 : index
    %c0_113 = arith.constant 0 : index
    %274 = vector.load %arg15[%c0_111, %c0_112, %c0_113] : memref<16x2x48xbf16, #tpu.memory_space<vmem>>, vector<16x2x48xbf16>
    tpu.vector_store %arg15[%c0_111, %c0_112, %c0_113], %273 {strides = array<i32>} : memref<16x2x48xbf16, #tpu.memory_space<vmem>>, vector<16x2x48xbf16>,
    %275 = vector.extract_strided_slice %271 {offsets = [0, 0, 48], sizes = [16, 2, 48], strides = [1, 1, 1]} : vector<16x2x96xf32> to vector<16x2x48xf32>
    %276 = arith.truncf %275 : vector<16x2x48xf32> to vector<16x2x48xbf16>
    %c0_114 = arith.constant 0 : index
    %c0_115 = arith.constant 0 : index
    %c0_116 = arith.constant 0 : index
    %277 = vector.load %arg16[%c0_114, %c0_115, %c0_116] : memref<16x2x48xbf16, #tpu.memory_space<vmem>>, vector<16x2x48xbf16>
    tpu.vector_store %arg16[%c0_114, %c0_115, %c0_116], %276 {strides = array<i32>} : memref<16x2x48xbf16, #tpu.memory_space<vmem>>, vector<16x2x48xbf16>,
    return
  }
  func.func @transform_0(%arg0: i32) -> (i32, i32, i32) {
    %c0_i32 = arith.constant 0 : i32
    %c0_i32_0 = arith.constant 0 : i32
    %c0_i32_1 = arith.constant 0 : i32
    return %c0_i32, %arg0, %c0_i32_0 : i32, i32, i32
  }
  func.func @transform_1(%arg0: i32) -> (i32, i32) {
    %c0_i32 = arith.constant 0 : i32
    %c0_i32_0 = arith.constant 0 : i32
    %c0_i32_1 = arith.constant 0 : i32
    return %c0_i32, %c0_i32_0 : i32, i32
  }
  func.func @transform_2(%arg0: i32) -> (i32, i32) {
    %c0_i32 = arith.constant 0 : i32
    %c0_i32_0 = arith.constant 0 : i32
    %c0_i32_1 = arith.constant 0 : i32
    return %c0_i32, %c0_i32_0 : i32, i32
  }
  func.func @transform_3(%arg0: i32) -> (i32, i32) {
    %c0_i32 = arith.constant 0 : i32
    %c0_i32_0 = arith.constant 0 : i32
    %c0_i32_1 = arith.constant 0 : i32
    return %c0_i32, %c0_i32_0 : i32, i32
  }
  func.func @transform_4(%arg0: i32) -> (i32, i32) {
    %c0_i32 = arith.constant 0 : i32
    %c0_i32_0 = arith.constant 0 : i32
    %c0_i32_1 = arith.constant 0 : i32
    return %c0_i32, %c0_i32_0 : i32, i32
  }
  func.func @transform_5(%arg0: i32) -> (i32, i32) {
    %c0_i32 = arith.constant 0 : i32
    %c0_i32_0 = arith.constant 0 : i32
    %c0_i32_1 = arith.constant 0 : i32
    return %c0_i32, %c0_i32_0 : i32, i32
  }
  func.func @transform_6(%arg0: i32) -> (i32, i32) {
    %c0_i32 = arith.constant 0 : i32
    %c0_i32_0 = arith.constant 0 : i32
    %c0_i32_1 = arith.constant 0 : i32
    return %c0_i32, %c0_i32_0 : i32, i32
  }
  func.func @transform_7(%arg0: i32) -> (i32, i32) {
    %c0_i32 = arith.constant 0 : i32
    %c0_i32_0 = arith.constant 0 : i32
    %c0_i32_1 = arith.constant 0 : i32
    return %c0_i32, %c0_i32_0 : i32, i32
  }
  func.func @transform_8(%arg0: i32) -> (i32, i32) {
    %c0_i32 = arith.constant 0 : i32
    %c0_i32_0 = arith.constant 0 : i32
    %c0_i32_1 = arith.constant 0 : i32
    return %c0_i32, %c0_i32_0 : i32, i32
  }
  func.func @transform_9(%arg0: i32) -> (i32, i32) {
    %c0_i32 = arith.constant 0 : i32
    %c0_i32_0 = arith.constant 0 : i32
    %c0_i32_1 = arith.constant 0 : i32
    return %c0_i32, %c0_i32_0 : i32, i32
  }
  func.func @transform_10(%arg0: i32) -> (i32, i32, i32) {
    %c0_i32 = arith.constant 0 : i32
    %c0_i32_0 = arith.constant 0 : i32
    %c0_i32_1 = arith.constant 0 : i32
    %c0_i32_2 = arith.constant 0 : i32
    return %c0_i32, %c0_i32_0, %c0_i32_1 : i32, i32, i32
  }
  func.func @transform_11(%arg0: i32) -> (i32, i32, i32) {
    %c0_i32 = arith.constant 0 : i32
    %c0_i32_0 = arith.constant 0 : i32
    %c0_i32_1 = arith.constant 0 : i32
    %c0_i32_2 = arith.constant 0 : i32
    return %c0_i32, %c0_i32_0, %c0_i32_1 : i32, i32, i32
  }
  func.func @transform_12(%arg0: i32) -> (i32, i32) {
    %c0_i32 = arith.constant 0 : i32
    %c0_i32_0 = arith.constant 0 : i32
    %c0_i32_1 = arith.constant 0 : i32
    return %c0_i32, %c0_i32_0 : i32, i32
  }
  func.func @transform_13(%arg0: i32) -> (i32, i32) {
    %c0_i32 = arith.constant 0 : i32
    %c0_i32_0 = arith.constant 0 : i32
    %c0_i32_1 = arith.constant 0 : i32
    return %c0_i32, %c0_i32_0 : i32, i32
  }
  func.func @transform_14(%arg0: i32) -> (i32, i32, i32) {
    %c0_i32 = arith.constant 0 : i32
    %c0_i32_0 = arith.constant 0 : i32
    %c0_i32_1 = arith.constant 0 : i32
    return %c0_i32, %arg0, %c0_i32_0 : i32, i32, i32
  }
  func.func @transform_15(%arg0: i32) -> (i32, i32, i32) {
    %c0_i32 = arith.constant 0 : i32
    %c0_i32_0 = arith.constant 0 : i32
    %c0_i32_1 = arith.constant 0 : i32
    return %c0_i32, %arg0, %c0_i32_0 : i32, i32, i32
  }
}

</mosaic_0001>

<llo_original>
// kernel: tpu_custom_call.1
$region0: #{tpu_custom_call.1}
  #allocation0 [shape = 'u32[]', space=smem, size = 0x4, offset = 0x4, fixed_abs, tag = 'smem constant byte address 0x4 - core index']
  #allocation1 [shape = 'u32[144,128]{1,0:T(1,128)}', space=vmem, size = 0x12000, scoped, tag = 'internal scratch']
  %s0 = inlined_call_operand.vmem [shape: f32[16,2,8], index: 0, kind: input, shape index: {}]
  %s1 = inlined_call_operand.vmem [shape: bf16[128,256], index: 1, kind: input, shape index: {}]
  %s2 = inlined_call_operand.vmem [shape: f32[1,256], index: 2, kind: input, shape index: {}]
  %s3 = inlined_call_operand.vmem [shape: f32[1,256], index: 3, kind: input, shape index: {}]
  %s4 = inlined_call_operand.vmem [shape: bf16[768,16], index: 4, kind: input, shape index: {}]
  %s5 = inlined_call_operand.vmem [shape: f32[1,16], index: 5, kind: input, shape index: {}]
  %s6 = inlined_call_operand.vmem [shape: f32[1,16], index: 6, kind: input, shape index: {}]
  %s7 = inlined_call_operand.vmem [shape: bf16[48,8], index: 7, kind: input, shape index: {}]
  %s8 = inlined_call_operand.vmem [shape: f32[1,8], index: 8, kind: input, shape index: {}]
  %s9 = inlined_call_operand.vmem [shape: f32[1,8], index: 9, kind: input, shape index: {}]
  %s10 = inlined_call_operand.vmem [shape: bf16[4,8,16], index: 10, kind: input, shape index: {}]
  %s11 = inlined_call_operand.vmem [shape: f32[4,1,16], index: 11, kind: input, shape index: {}]
  %s12 = inlined_call_operand.vmem [shape: bf16[8,96], index: 12, kind: input, shape index: {}]
  %s13 = inlined_call_operand.vmem [shape: f32[1,96], index: 13, kind: input, shape index: {}]
  %s14 = inlined_call_operand.hbm [shape: bf16[16,2,48], index: 14, kind: output, shape index: {0}]
  %s15 = inlined_call_operand.hbm [shape: bf16[16,2,48], index: 15, kind: output, shape index: {1}]
  %16 = xla_tuple %s14, %s15
  %s17 = sld [smem:[#allocation0]]
  $region74: #{tpu_custom_call.1} parent=0
    _
  %s19 = ssub.s32 1, %s17
  %s20 = scalar_select 0, %s19, %s17
  $region1: #{tpu_custom_call.1} parent=0
    #allocation2 [shape = 'u8[8192]{0}', space=vmem, size = 0x2000, scoped, tag = 'output window, operand 0, single buffered']
    #allocation3 [shape = 's32[1]{0}', space=sflag, size = 0x4, scoped, tag = 'scoped memory for tpu_custom_call.1']
    #allocation4 [shape = 'u8[8192]{0}', space=vmem, size = 0x2000, scoped, tag = 'output window, operand 1, single buffered']
    #allocation5 [shape = 's32[1]{0}', space=sflag, size = 0x4, scoped, tag = 'scoped memory for tpu_custom_call.1']
    %21 = vsyncpa [#allocation3], 0
    %22 = vsyncpa [#allocation5], 0
    // Predicated region
    $region2: #{tpu_custom_call.1} parent=1 // pred_check
      _
    $region3: #{tpu_custom_call.1} parent=1 // pred_check_branch
      %24 = sbr.rel (0) target = $region5
    $region4: #{tpu_custom_call.1} parent=1 // pred_region
      _
    $region5: #{tpu_custom_call.1} parent=1 // pred_fallthru
      _
    // Predicated region
    $region6: #{tpu_custom_call.1} parent=1 // pred_check
      _
    $region7: #{tpu_custom_call.1} parent=1 // pred_check_branch
      %26 = sbr.rel (0) target = $region9
    $region8: #{tpu_custom_call.1} parent=1 // pred_region
      _
    $region9: #{tpu_custom_call.1} parent=1 // pred_fallthru
      _
    // Predicated region
    $region10: #{tpu_custom_call.1} parent=1 // pred_check
      _
    $region11: #{tpu_custom_call.1} parent=1 // pred_check_branch
      %28 = sbr.rel (0) target = $region13
    $region12: #{tpu_custom_call.1} parent=1 // pred_region
      _
    $region13: #{tpu_custom_call.1} parent=1 // pred_fallthru
      _
    // Predicated region
    $region14: #{tpu_custom_call.1} parent=1 // pred_check
      _
    $region15: #{tpu_custom_call.1} parent=1 // pred_check_branch
      %30 = sbr.rel (0) target = $region17
    $region16: #{tpu_custom_call.1} parent=1 // pred_region
      _
    $region17: #{tpu_custom_call.1} parent=1 // pred_fallthru
      _
    // Predicated region
    $region18: #{tpu_custom_call.1} parent=1 // pred_check
      _
    $region19: #{tpu_custom_call.1} parent=1 // pred_check_branch
      %32 = sbr.rel (0) target = $region21
    $region20: #{tpu_custom_call.1} parent=1 // pred_region
      _
    $region21: #{tpu_custom_call.1} parent=1 // pred_fallthru
      _
    // Predicated region
    $region22: #{tpu_custom_call.1} parent=1 // pred_check
      _
    $region23: #{tpu_custom_call.1} parent=1 // pred_check_branch
      %34 = sbr.rel (0) target = $region25
    $region24: #{tpu_custom_call.1} parent=1 // pred_region
      _
    $region25: #{tpu_custom_call.1} parent=1 // pred_fallthru
      _
    // Predicated region
    $region26: #{tpu_custom_call.1} parent=1 // pred_check
      _
    $region27: #{tpu_custom_call.1} parent=1 // pred_check_branch
      %36 = sbr.rel (0) target = $region29
    $region28: #{tpu_custom_call.1} parent=1 // pred_region
      _
    $region29: #{tpu_custom_call.1} parent=1 // pred_fallthru
      _
    // Predicated region
    $region30: #{tpu_custom_call.1} parent=1 // pred_check
      _
    $region31: #{tpu_custom_call.1} parent=1 // pred_check_branch
      %38 = sbr.rel (0) target = $region33
    $region32: #{tpu_custom_call.1} parent=1 // pred_region
      _
    $region33: #{tpu_custom_call.1} parent=1 // pred_fallthru
      _
    // Predicated region
    $region34: #{tpu_custom_call.1} parent=1 // pred_check
      _
    $region35: #{tpu_custom_call.1} parent=1 // pred_check_branch
      %40 = sbr.rel (0) target = $region37
    $region36: #{tpu_custom_call.1} parent=1 // pred_region
      _
    $region37: #{tpu_custom_call.1} parent=1 // pred_fallthru
      _
    // Predicated region
    $region38: #{tpu_custom_call.1} parent=1 // pred_check
      _
    $region39: #{tpu_custom_call.1} parent=1 // pred_check_branch
      %42 = sbr.rel (0) target = $region41
    $region40: #{tpu_custom_call.1} parent=1 // pred_region
      _
    $region41: #{tpu_custom_call.1} parent=1 // pred_fallthru
      _
    // Predicated region
    $region42: #{tpu_custom_call.1} parent=1 // pred_check
      _
    $region43: #{tpu_custom_call.1} parent=1 // pred_check_branch
      %44 = sbr.rel (0) target = $region45
    $region44: #{tpu_custom_call.1} parent=1 // pred_region
      _
    $region45: #{tpu_custom_call.1} parent=1 // pred_fallthru
      _
    // Predicated region
    $region46: #{tpu_custom_call.1} parent=1 // pred_check
      _
    $region47: #{tpu_custom_call.1} parent=1 // pred_check_branch
      %46 = sbr.rel (0) target = $region49
    $region48: #{tpu_custom_call.1} parent=1 // pred_region
      _
    $region49: #{tpu_custom_call.1} parent=1 // pred_fallthru
      _
    // Predicated region
    $region50: #{tpu_custom_call.1} parent=1 // pred_check
      _
    $region51: #{tpu_custom_call.1} parent=1 // pred_check_branch
      %48 = sbr.rel (0) target = $region53
    $region52: #{tpu_custom_call.1} parent=1 // pred_region
      _
    $region53: #{tpu_custom_call.1} parent=1 // pred_fallthru
      _
    // Predicated region
    $region54: #{tpu_custom_call.1} parent=1 // pred_check
      _
    $region55: #{tpu_custom_call.1} parent=1 // pred_check_branch
      %50 = sbr.rel (0) target = $region57
    $region56: #{tpu_custom_call.1} parent=1 // pred_region
      _
    $region57: #{tpu_custom_call.1} parent=1 // pred_fallthru
      _
    %v52 = vld [vmem:[%s0] sm:$0x3]
    %v53 = vld [vmem:[%s0 + $0x2] sm:$0x3]
    %v54 = vld [vmem:[%s0 + $0x4] sm:$0x3]
    %v55 = vld [vmem:[%s0 + $0x6] sm:$0x3]
    %v56 = vld [vmem:[%s0 + $0x8] sm:$0x3]
    %v57 = vld [vmem:[%s0 + $0xa] sm:$0x3]
    %v58 = vld [vmem:[%s0 + $0xc] sm:$0x3]
    %v59 = vld [vmem:[%s0 + $0xe] sm:$0x3]
    %v60 = vld [vmem:[%s0 + $0x10] sm:$0x3]
    %v61 = vld [vmem:[%s0 + $0x12] sm:$0x3]
    %v62 = vld [vmem:[%s0 + $0x14] sm:$0x3]
    %v63 = vld [vmem:[%s0 + $0x16] sm:$0x3]
    %v64 = vld [vmem:[%s0 + $0x18] sm:$0x3]
    %v65 = vld [vmem:[%s0 + $0x1a] sm:$0x3]
    %v66 = vld [vmem:[%s0 + $0x1c] sm:$0x3]
    %v67 = vld [vmem:[%s0 + $0x1e] sm:$0x3]
    %v84 = vcombine.low %v52, %v53
    %v85 = vcombine.low %v54, %v55
    %v87 = vunpack.c.l.s4 1983009808
    %v88 = vunpack.c.0.s8 %v87
    %v89 = vlaneseq
    %v90 = vshrl.u32 %v89, 7
    %v91 = vsub.s32 %v88, %v90
    %v92 = vrot.slane %v84, %v91
    %v94 = vunpack.c.l.s4 1983009808
    %v95 = vunpack.c.0.s8 %v94
    %v96 = vlaneseq
    %v97 = vshrl.u32 %v96, 7
    %v98 = vsub.s32 %v95, %v97
    %v99 = vrot.slane %v85, %v98
    %v100 = vcombine.low %v92, %v99
    %v101 = vcombine.low %v56, %v57
    %v102 = vcombine.low %v58, %v59
    %v104 = vunpack.c.l.s4 1983009808
    %v105 = vunpack.c.0.s8 %v104
    %v106 = vlaneseq
    %v107 = vshrl.u32 %v106, 7
    %v108 = vsub.s32 %v105, %v107
    %v109 = vrot.slane %v101, %v108
    %v111 = vunpack.c.l.s4 1983009808
    %v112 = vunpack.c.0.s8 %v111
    %v113 = vlaneseq
    %v114 = vshrl.u32 %v113, 7
    %v115 = vsub.s32 %v112, %v114
    %v116 = vrot.slane %v102, %v115
    %v117 = vcombine.low %v109, %v116
    %v118 = vcombine.low %v60, %v61
    %v119 = vcombine.low %v62, %v63
    %v121 = vunpack.c.l.s4 1983009808
    %v122 = vunpack.c.0.s8 %v121
    %v123 = vlaneseq
    %v124 = vshrl.u32 %v123, 7
    %v125 = vsub.s32 %v122, %v124
    %v126 = vrot.slane %v118, %v125
    %v128 = vunpack.c.l.s4 1983009808
    %v129 = vunpack.c.0.s8 %v128
    %v130 = vlaneseq
    %v131 = vshrl.u32 %v130, 7
    %v132 = vsub.s32 %v129, %v131
    %v133 = vrot.slane %v119, %v132
    %v134 = vcombine.low %v126, %v133
    %v135 = vcombine.low %v64, %v65
    %v136 = vcombine.low %v66, %v67
    %v138 = vunpack.c.l.s4 1983009808
    %v139 = vunpack.c.0.s8 %v138
    %v140 = vlaneseq
    %v141 = vshrl.u32 %v140, 7
    %v142 = vsub.s32 %v139, %v141
    %v143 = vrot.slane %v135, %v142
    %v145 = vunpack.c.l.s4 1983009808
    %v146 = vunpack.c.0.s8 %v145
    %v147 = vlaneseq
    %v148 = vshrl.u32 %v147, 7
    %v149 = vsub.s32 %v146, %v148
    %v150 = vrot.slane %v136, %v149
    %v151 = vcombine.low %v143, %v150
    %v156 = vlaneseq
    %v157 = vshrl.u32 %v156, 7
    %v158 = vadd.s32 %v157, 8
    %v159 = vadd.s32 %v157, 16
    %v160 = vadd.s32 %v157, 24
    %vm161 = vcmp.lt.s32.totalorder %v157, 16
    %vm162 = vcmp.lt.s32.totalorder %v158, 16
    %vm163 = vcmp.lt.s32.totalorder %v159, 16
    %vm164 = vcmp.lt.s32.totalorder %v160, 16
    %v165 = vsel %vm161, 0.0, %v134
    %v166 = vsel %vm162, 0.0, %v151
    %v167 = vsel %vm163, 0.0, %v100
    %v168 = vsel %vm164, 0.0, %v117
    %v169 = vpack.c.bf16 %v166, %v165
    %v170 = vpack.c.bf16 %v168, %v167
    %v171 = vrot.slane %v100, 2
    %v172 = vrot.slane %v117, 2
    %v173 = vrot.slane %v134, 2
    %v174 = vrot.slane %v151, 2
    %vm175 = vcmp.lt.s32.totalorder %v157, 6
    %v176 = vsel %vm175, %v173, %v174
    %v177 = vsel %vm175, %v172, %v173
    %v178 = vsel %vm175, %v171, %v172
    %v179 = vsel %vm175, %v174, %v171
    %vm180 = vcmp.lt.s32.totalorder %v157, 14
    %vm181 = vcmp.lt.s32.totalorder %v158, 14
    %vm182 = vcmp.lt.s32.totalorder %v159, 14
    %vm183 = vcmp.lt.s32.totalorder %v160, 14
    %v184 = vsel %vm180, 0.0, %v176
    %v185 = vsel %vm181, 0.0, %v179
    %v186 = vsel %vm182, 0.0, %v178
    %v187 = vsel %vm183, 0.0, %v177
    %v188 = vpack.c.bf16 %v185, %v184
    %v189 = vpack.c.bf16 %v187, %v186
    %v190 = vrot.slane %v100, 4
    %v191 = vrot.slane %v117, 4
    %v192 = vrot.slane %v134, 4
    %v193 = vrot.slane %v151, 4
    %vm194 = vcmp.lt.s32.totalorder %v157, 4
    %v195 = vsel %vm194, %v192, %v193
    %v196 = vsel %vm194, %v191, %v192
    %v197 = vsel %vm194, %v190, %v191
    %v198 = vsel %vm194, %v193, %v190
    %vm199 = vcmp.lt.s32.totalorder %v157, 12
    %vm200 = vcmp.lt.s32.totalorder %v158, 12
    %vm201 = vcmp.lt.s32.totalorder %v159, 12
    %vm202 = vcmp.lt.s32.totalorder %v160, 12
    %v203 = vsel %vm199, 0.0, %v195
    %v204 = vsel %vm200, 0.0, %v198
    %v205 = vsel %vm201, 0.0, %v197
    %v206 = vsel %vm202, 0.0, %v196
    %v207 = vpack.c.bf16 %v204, %v203
    %v208 = vpack.c.bf16 %v206, %v205
    %v209 = vrot.slane %v100, 6
    %v210 = vrot.slane %v117, 6
    %v211 = vrot.slane %v134, 6
    %v212 = vrot.slane %v151, 6
    %vm213 = vcmp.lt.s32.totalorder %v157, 2
    %v214 = vsel %vm213, %v211, %v212
    %v215 = vsel %vm213, %v210, %v211
    %v216 = vsel %vm213, %v209, %v210
    %v217 = vsel %vm213, %v212, %v209
    %vm218 = vcmp.lt.s32.totalorder %v157, 10
    %vm219 = vcmp.lt.s32.totalorder %v158, 10
    %vm220 = vcmp.lt.s32.totalorder %v159, 10
    %vm221 = vcmp.lt.s32.totalorder %v160, 10
    %v222 = vsel %vm218, 0.0, %v214
    %v223 = vsel %vm219, 0.0, %v217
    %v224 = vsel %vm220, 0.0, %v216
    %v225 = vsel %vm221, 0.0, %v215
    %v226 = vpack.c.bf16 %v223, %v222
    %v227 = vpack.c.bf16 %v225, %v224
    %vm228 = vcmp.lt.s32.totalorder %v157, 8
    %vm229 = vcmp.lt.s32.totalorder %v158, 8
    %vm230 = vcmp.lt.s32.totalorder %v159, 8
    %vm231 = vcmp.lt.s32.totalorder %v160, 8
    %v232 = vsel %vm228, 0.0, %v151
    %v233 = vsel %vm229, 0.0, %v100
    %v234 = vsel %vm230, 0.0, %v117
    %v235 = vsel %vm231, 0.0, %v134
    %v236 = vpack.c.bf16 %v233, %v232
    %v237 = vpack.c.bf16 %v235, %v234
    %vm238 = vcmp.lt.s32.totalorder %v158, 6
    %vm239 = vcmp.lt.s32.totalorder %v159, 6
    %vm240 = vcmp.lt.s32.totalorder %v160, 6
    %v241 = vsel %vm175, 0.0, %v179
    %v242 = vsel %vm238, 0.0, %v178
    %v243 = vsel %vm239, 0.0, %v177
    %v244 = vsel %vm240, 0.0, %v176
    %v245 = vpack.c.bf16 %v242, %v241
    %v246 = vpack.c.bf16 %v244, %v243
    %vm247 = vcmp.lt.s32.totalorder %v158, 4
    %vm248 = vcmp.lt.s32.totalorder %v159, 4
    %vm249 = vcmp.lt.s32.totalorder %v160, 4
    %v250 = vsel %vm194, 0.0, %v198
    %v251 = vsel %vm247, 0.0, %v197
    %v252 = vsel %vm248, 0.0, %v196
    %v253 = vsel %vm249, 0.0, %v195
    %v254 = vpack.c.bf16 %v251, %v250
    %v255 = vpack.c.bf16 %v253, %v252
    %vm256 = vcmp.lt.s32.totalorder %v158, 2
    %vm257 = vcmp.lt.s32.totalorder %v159, 2
    %vm258 = vcmp.lt.s32.totalorder %v160, 2
    %v259 = vsel %vm213, 0.0, %v217
    %v260 = vsel %vm256, 0.0, %v216
    %v261 = vsel %vm257, 0.0, %v215
    %v262 = vsel %vm258, 0.0, %v214
    %v263 = vpack.c.bf16 %v260, %v259
    %v264 = vpack.c.bf16 %v262, %v261
    %v265 = vpack.c.bf16 %v117, %v100
    %v266 = vpack.c.bf16 %v151, %v134
    %vm267 = vcmp.ge.s32.totalorder %v157, 30
    %vm268 = vcmp.ge.s32.totalorder %v158, 30
    %vm269 = vcmp.ge.s32.totalorder %v159, 30
    %vm270 = vcmp.ge.s32.totalorder %v160, 30
    %v271 = vsel %vm267, 0.0, %v178
    %v272 = vsel %vm268, 0.0, %v177
    %v273 = vsel %vm269, 0.0, %v176
    %v274 = vsel %vm270, 0.0, %v179
    %v275 = vpack.c.bf16 %v272, %v271
    %v276 = vpack.c.bf16 %v274, %v273
    %vm277 = vcmp.ge.s32.totalorder %v157, 28
    %vm278 = vcmp.ge.s32.totalorder %v158, 28
    %vm279 = vcmp.ge.s32.totalorder %v159, 28
    %vm280 = vcmp.ge.s32.totalorder %v160, 28
    %v281 = vsel %vm277, 0.0, %v197
    %v282 = vsel %vm278, 0.0, %v196
    %v283 = vsel %vm279, 0.0, %v195
    %v284 = vsel %vm280, 0.0, %v198
    %v285 = vpack.c.bf16 %v282, %v281
    %v286 = vpack.c.bf16 %v284, %v283
    %vm287 = vcmp.ge.s32.totalorder %v157, 26
    %vm288 = vcmp.ge.s32.totalorder %v158, 26
    %vm289 = vcmp.ge.s32.totalorder %v159, 26
    %vm290 = vcmp.ge.s32.totalorder %v160, 26
    %v291 = vsel %vm287, 0.0, %v216
    %v292 = vsel %vm288, 0.0, %v215
    %v293 = vsel %vm289, 0.0, %v214
    %v294 = vsel %vm290, 0.0, %v217
    %v295 = vpack.c.bf16 %v292, %v291
    %v296 = vpack.c.bf16 %v294, %v293
    %vm297 = vcmp.ge.s32.totalorder %v157, 24
    %vm298 = vcmp.ge.s32.totalorder %v158, 24
    %vm299 = vcmp.ge.s32.totalorder %v159, 24
    %vm300 = vcmp.ge.s32.totalorder %v160, 24
    %v301 = vsel %vm297, 0.0, %v117
    %v302 = vsel %vm298, 0.0, %v134
    %v303 = vsel %vm299, 0.0, %v151
    %v304 = vsel %vm300, 0.0, %v100
    %v305 = vpack.c.bf16 %v302, %v301
    %v306 = vpack.c.bf16 %v304, %v303
    %vm307 = vcmp.ge.s32.totalorder %v157, 22
    %vm308 = vcmp.ge.s32.totalorder %v158, 22
    %vm309 = vcmp.ge.s32.totalorder %v159, 22
    %vm310 = vcmp.ge.s32.totalorder %v160, 22
    %v311 = vsel %vm307, 0.0, %v177
    %v312 = vsel %vm308, 0.0, %v176
    %v313 = vsel %vm309, 0.0, %v179
    %v314 = vsel %vm310, 0.0, %v178
    %v315 = vpack.c.bf16 %v312, %v311
    %v316 = vpack.c.bf16 %v314, %v313
    %vm317 = vcmp.ge.s32.totalorder %v157, 20
    %vm318 = vcmp.ge.s32.totalorder %v158, 20
    %vm319 = vcmp.ge.s32.totalorder %v159, 20
    %vm320 = vcmp.ge.s32.totalorder %v160, 20
    %v321 = vsel %vm317, 0.0, %v196
    %v322 = vsel %vm318, 0.0, %v195
    %v323 = vsel %vm319, 0.0, %v198
    %v324 = vsel %vm320, 0.0, %v197
    %v325 = vpack.c.bf16 %v322, %v321
    %v326 = vpack.c.bf16 %v324, %v323
    %vm327 = vcmp.ge.s32.totalorder %v157, 18
    %vm328 = vcmp.ge.s32.totalorder %v158, 18
    %vm329 = vcmp.ge.s32.totalorder %v159, 18
    %vm330 = vcmp.ge.s32.totalorder %v160, 18
    %v331 = vsel %vm327, 0.0, %v215
    %v332 = vsel %vm328, 0.0, %v214
    %v333 = vsel %vm329, 0.0, %v217
    %v334 = vsel %vm330, 0.0, %v216
    %v335 = vpack.c.bf16 %v332, %v331
    %v336 = vpack.c.bf16 %v334, %v333
    %339 = vrot.lane.b32.xlu0 %v188, 8
    %v340 = vpop.permute.xlu0 %339
    %341 = vrot.lane.b32.xlu0 %v189, 8
    %v342 = vpop.permute.xlu0 %341
    %345 = vrot.lane.b32.xlu0 %v207, 16
    %v346 = vpop.permute.xlu0 %345
    %347 = vrot.lane.b32.xlu0 %v208, 16
    %v348 = vpop.permute.xlu0 %347
    %351 = vrot.lane.b32.xlu0 %v226, 24
    %v352 = vpop.permute.xlu0 %351
    %353 = vrot.lane.b32.xlu0 %v227, 24
    %v354 = vpop.permute.xlu0 %353
    %357 = vrot.lane.b32.xlu0 %v236, 32
    %v358 = vpop.permute.xlu0 %357
    %359 = vrot.lane.b32.xlu0 %v237, 32
    %v360 = vpop.permute.xlu0 %359
    %363 = vrot.lane.b32.xlu0 %v245, 40
    %v364 = vpop.permute.xlu0 %363
    %365 = vrot.lane.b32.xlu0 %v246, 40
    %v366 = vpop.permute.xlu0 %365
    %369 = vrot.lane.b32.xlu0 %v254, 48
    %v370 = vpop.permute.xlu0 %369
    %371 = vrot.lane.b32.xlu0 %v255, 48
    %v372 = vpop.permute.xlu0 %371
    %375 = vrot.lane.b32.xlu0 %v263, 56
    %v376 = vpop.permute.xlu0 %375
    %377 = vrot.lane.b32.xlu0 %v264, 56
    %v378 = vpop.permute.xlu0 %377
    %381 = vrot.lane.b32.xlu0 %v265, 64
    %v382 = vpop.permute.xlu0 %381
    %383 = vrot.lane.b32.xlu0 %v266, 64
    %v384 = vpop.permute.xlu0 %383
    %387 = vrot.lane.b32.xlu0 %v275, 72
    %v388 = vpop.permute.xlu0 %387
    %389 = vrot.lane.b32.xlu0 %v276, 72
    %v390 = vpop.permute.xlu0 %389
    %393 = vrot.lane.b32.xlu0 %v285, 80
    %v394 = vpop.permute.xlu0 %393
    %395 = vrot.lane.b32.xlu0 %v286, 80
    %v396 = vpop.permute.xlu0 %395
    %399 = vrot.lane.b32.xlu0 %v295, 88
    %v400 = vpop.permute.xlu0 %399
    %401 = vrot.lane.b32.xlu0 %v296, 88
    %v402 = vpop.permute.xlu0 %401
    %405 = vrot.lane.b32.xlu0 %v305, 96
    %v406 = vpop.permute.xlu0 %405
    %407 = vrot.lane.b32.xlu0 %v306, 96
    %v408 = vpop.permute.xlu0 %407
    %411 = vrot.lane.b32.xlu0 %v315, 104
    %v412 = vpop.permute.xlu0 %411
    %413 = vrot.lane.b32.xlu0 %v316, 104
    %v414 = vpop.permute.xlu0 %413
    %417 = vrot.lane.b32.xlu0 %v325, 112
    %v418 = vpop.permute.xlu0 %417
    %419 = vrot.lane.b32.xlu0 %v326, 112
    %v420 = vpop.permute.xlu0 %419
    %423 = vrot.lane.b32.xlu0 %v335, 120
    %v424 = vpop.permute.xlu0 %423
    %425 = vrot.lane.b32.xlu0 %v336, 120
    %v426 = vpop.permute.xlu0 %425
    %vm427 = vcmask 64512
    %v430 = vsel %vm427, %v169, %v340
    %v433 = vsel %vm427, %v170, %v342
    %vm434 = vcmask 130048
    %v436 = vsel %vm434, %v430, %v346
    %v438 = vsel %vm434, %v433, %v348
    %vm439 = vcmask 195584
    %v441 = vsel %vm439, %v436, %v352
    %v443 = vsel %vm439, %v438, %v354
    %vm444 = vcmask 261120
    %v446 = vsel %vm444, %v441, %v358
    %v448 = vsel %vm444, %v443, %v360
    %vm449 = vcmask 326656
    %v451 = vsel %vm449, %v446, %v364
    %v453 = vsel %vm449, %v448, %v366
    %vm454 = vcmask 392192
    %v456 = vsel %vm454, %v451, %v370
    %v458 = vsel %vm454, %v453, %v372
    %vm459 = vcmask 457728
    %v461 = vsel %vm459, %v456, %v376
    %v463 = vsel %vm459, %v458, %v378
    %vm464 = vcmask 523264
    %v466 = vsel %vm464, %v461, %v382
    %v468 = vsel %vm464, %v463, %v384
    %vm469 = vcmask 588800
    %v471 = vsel %vm469, %v466, %v388
    %v473 = vsel %vm469, %v468, %v390
    %vm474 = vcmask 654336
    %v476 = vsel %vm474, %v471, %v394
    %v478 = vsel %vm474, %v473, %v396
    %vm479 = vcmask 719872
    %v481 = vsel %vm479, %v476, %v400
    %v483 = vsel %vm479, %v478, %v402
    %vm484 = vcmask 785408
    %v486 = vsel %vm484, %v481, %v406
    %v488 = vsel %vm484, %v483, %v408
    %vm489 = vcmask 850944
    %v491 = vsel %vm489, %v486, %v412
    %v493 = vsel %vm489, %v488, %v414
    %vm494 = vcmask 916480
    %v496 = vsel %vm494, %v491, %v418
    %v498 = vsel %vm494, %v493, %v420
    %vm499 = vcmask 982016
    %v501 = vsel %vm499, %v496, %v424
    %v504 = vsel %vm499, %v498, %v426
    %v506 = vld [vmem:[%s1] sm:$0xff]
    %v507 = vld [vmem:[%s1 + $0x8] sm:$0xff]
    %v508 = vld [vmem:[%s1 + $0x10] sm:$0xff]
    %v509 = vld [vmem:[%s1 + $0x18] sm:$0xff]
    %v510 = vld [vmem:[%s1 + $0x20] sm:$0xff]
    %v511 = vld [vmem:[%s1 + $0x28] sm:$0xff]
    %v512 = vld [vmem:[%s1 + $0x30] sm:$0xff]
    %v513 = vld [vmem:[%s1 + $0x38] sm:$0xff]
    %v514 = vld [vmem:[%s1 + $0x40] sm:$0xff]
    %v515 = vld [vmem:[%s1 + $0x48] sm:$0xff]
    %v516 = vld [vmem:[%s1 + $0x50] sm:$0xff]
    %v517 = vld [vmem:[%s1 + $0x58] sm:$0xff]
    %v518 = vld [vmem:[%s1 + $0x60] sm:$0xff]
    %v519 = vld [vmem:[%s1 + $0x68] sm:$0xff]
    %v520 = vld [vmem:[%s1 + $0x70] sm:$0xff]
    %v521 = vld [vmem:[%s1 + $0x78] sm:$0xff]
    %v538 = vunpack.c.l.b16 %v506
    %v539 = vunpack.c.h.b16 %v506
    %v540 = vunpack.c.l.b16 %v507
    %v541 = vunpack.c.h.b16 %v507
    %v542 = vunpack.c.l.b16 %v508
    %v543 = vunpack.c.h.b16 %v508
    %v544 = vunpack.c.l.b16 %v509
    %v545 = vunpack.c.h.b16 %v509
    %v546 = vunpack.c.l.b16 %v510
    %v547 = vunpack.c.h.b16 %v510
    %v548 = vunpack.c.l.b16 %v511
    %v549 = vunpack.c.h.b16 %v511
    %v550 = vunpack.c.l.b16 %v512
    %v551 = vunpack.c.h.b16 %v512
    %v552 = vunpack.c.l.b16 %v513
    %v553 = vunpack.c.h.b16 %v513
    %v554 = vunpack.c.l.b16 %v514
    %v555 = vunpack.c.h.b16 %v514
    %v556 = vunpack.c.l.b16 %v515
    %v557 = vunpack.c.h.b16 %v515
    %v558 = vunpack.c.l.b16 %v516
    %v559 = vunpack.c.h.b16 %v516
    %v560 = vunpack.c.l.b16 %v517
    %v561 = vunpack.c.h.b16 %v517
    %v562 = vunpack.c.l.b16 %v518
    %v563 = vunpack.c.h.b16 %v518
    %v564 = vunpack.c.l.b16 %v519
    %v565 = vunpack.c.h.b16 %v519
    %v566 = vunpack.c.l.b16 %v520
    %v567 = vunpack.c.h.b16 %v520
    %v568 = vunpack.c.l.b16 %v521
    %v569 = vunpack.c.h.b16 %v521
    %v570 = vpack.c.b16 %v540, %v538
    %v571 = vpack.c.b16 %v541, %v539
    %v572 = vpack.c.b16 %v544, %v542
    %v573 = vpack.c.b16 %v545, %v543
    %v574 = vpack.c.b16 %v548, %v546
    %v575 = vpack.c.b16 %v549, %v547
    %v576 = vpack.c.b16 %v552, %v550
    %v577 = vpack.c.b16 %v553, %v551
    %v578 = vpack.c.b16 %v556, %v554
    %v579 = vpack.c.b16 %v557, %v555
    %v580 = vpack.c.b16 %v560, %v558
    %v581 = vpack.c.b16 %v561, %v559
    %v582 = vpack.c.b16 %v564, %v562
    %v583 = vpack.c.b16 %v565, %v563
    %v584 = vpack.c.b16 %v568, %v566
    %v585 = vpack.c.b16 %v569, %v567
    %602 = vmatprep.subr.bf16.mxu0 %v585
    %603 = vmatpush1.bf16.msra.mxu0 %v584
    %604 = vmatprep.subr.bf16.mxu0 %v583
    %605 = vmatpush1.bf16.msra.mxu0 %v582
    %606 = vmatprep.subr.bf16.mxu0 %v581
    %607 = vmatpush1.bf16.msra.mxu0 %v580
    %608 = vmatprep.subr.bf16.mxu0 %v579
    %609 = vmatpush1.bf16.msra.mxu0 %v578
    %610 = vmatprep.subr.bf16.mxu0 %v577
    %611 = vmatpush1.bf16.msra.mxu0 %v576
    %612 = vmatprep.subr.bf16.mxu0 %v575
    %613 = vmatpush1.bf16.msra.mxu0 %v574
    %614 = vmatprep.subr.bf16.mxu0 %v573
    %615 = vmatpush1.bf16.msra.mxu0 %v572
    %616 = vmatprep.subr.bf16.mxu0 %v571
    %617 = vmatpush1.bf16.msra.mxu0 %v570
    %618 = vmatprep.subr.bf16.mxu0 0
    %619 = vmatpush2.bf16.msra.mxu0 0
    %620 = vmatprep.subr.bf16.mxu0 0
    %621 = vmatpush2.bf16.msra.mxu0 0
    %622 = vmatprep.subr.bf16.mxu0 0
    %623 = vmatpush2.bf16.msra.mxu0 0
    %624 = vmatprep.subr.bf16.mxu0 0
    %625 = vmatpush2.bf16.msra.mxu0 0
    %626 = vmatprep.subr.bf16.mxu0 0
    %627 = vmatpush2.bf16.msra.mxu0 0
    %628 = vmatprep.subr.bf16.mxu0 0
    %629 = vmatpush2.bf16.msra.mxu0 0
    %630 = vmatprep.subr.bf16.mxu0 0
    %631 = vmatpush2.bf16.msra.mxu0 0
    %632 = vmatprep.subr.bf16.mxu0 0
    %633 = vmatpush2.bf16.msra.mxu0 0
    %634 = vmatprep.mubr.bf16.mxu0 0
    %635 = vmatmul.mubr.bf16.gmra.mxu0 %v501
    %v636 = vpop.f32.mrf.mxu0
    %v637 = vadd.f32 0.0, %v636
    %v638 = vpop.f32.mrf.mxu0
    %v639 = vadd.f32 0.0, %v638
    %v640 = vpop.f32.mrf.mxu0
    %v641 = vadd.f32 0.0, %v640
    %v642 = vpop.f32.mrf.mxu0
    %v643 = vadd.f32 0.0, %v642
    %644 = vmatprep.mubr.bf16.mxu0 0
    %645 = vmatmul.mubr.bf16.gmra.mxu0 %v504
    %v646 = vpop.f32.mrf.mxu0
    %v647 = vadd.f32 0.0, %v646
    %v648 = vpop.f32.mrf.mxu0
    %v649 = vadd.f32 0.0, %v648
    %v650 = vpop.f32.mrf.mxu0
    %v651 = vadd.f32 0.0, %v650
    %v652 = vpop.f32.mrf.mxu0
    %v653 = vadd.f32 0.0, %v652
    %654 = vdwg.mxu0
    %v655 = vld [vmem:[%s2] sm:$0x3]
    %v657 = vlaneseq
    %v658 = vshrl.u32 %v657, 7
    %v659 = vsub.s32 0, %v658
    %v660 = vrot.slane %v655, %v659
    %v661 = vlaneseq
    %v662 = vshrl.u32 %v661, 7
    %v663 = vsub.s32 1, %v662
    %v664 = vrot.slane %v655, %v663
    %v667 = vmul.f32 %v637, %v660
    %v668 = vmul.f32 %v639, %v664
    %v669 = vmul.f32 %v641, %v660
    %v670 = vmul.f32 %v643, %v664
    %v671 = vmul.f32 %v647, %v660
    %v672 = vmul.f32 %v649, %v664
    %v673 = vmul.f32 %v651, %v660
    %v674 = vmul.f32 %v653, %v664
    %v675 = vld [vmem:[%s3] sm:$0x3]
    %v677 = vlaneseq
    %v678 = vshrl.u32 %v677, 7
    %v679 = vsub.s32 0, %v678
    %v680 = vrot.slane %v675, %v679
    %v681 = vlaneseq
    %v682 = vshrl.u32 %v681, 7
    %v683 = vsub.s32 1, %v682
    %v684 = vrot.slane %v675, %v683
    %v687 = vadd.f32 %v667, %v680
    %v688 = vadd.f32 %v668, %v684
    %v689 = vadd.f32 %v669, %v680
    %v690 = vadd.f32 %v670, %v684
    %v691 = vadd.f32 %v671, %v680
    %v692 = vadd.f32 %v672, %v684
    %v693 = vadd.f32 %v673, %v680
    %v694 = vadd.f32 %v674, %v684
    %v695 = vmax.f32 %v687, 0.0
    %v696 = vmax.f32 %v688, 0.0
    %v697 = vmax.f32 %v689, 0.0
    %v698 = vmax.f32 %v690, 0.0
    %v699 = vmax.f32 %v691, 0.0
    %v700 = vmax.f32 %v692, 0.0
    %v701 = vmax.f32 %v693, 0.0
    %v702 = vmax.f32 %v694, 0.0
    %v703 = vrot.slane %v695, 6
    %v704 = vrot.slane %v696, 6
    %v705 = vrot.slane %v697, 6
    %v706 = vrot.slane %v698, 6
    %v707 = vrot.slane %v699, 6
    %v708 = vrot.slane %v700, 6
    %v709 = vrot.slane %v701, 6
    %v710 = vrot.slane %v702, 6
    %v711 = vsel %vm213, %v707, %v709
    %v712 = vsel %vm213, %v708, %v710
    %v713 = vsel %vm213, %v705, %v707
    %v714 = vsel %vm213, %v706, %v708
    %v715 = vsel %vm213, %v703, %v705
    %v716 = vsel %vm213, %v704, %v706
    %v717 = vsel %vm213, %v709, %v703
    %v718 = vsel %vm213, %v710, %v704
    %v719 = vsel %vm213, -inf, %v717
    %v720 = vsel %vm213, -inf, %v718
    %v721 = vsel %vm256, -inf, %v715
    %v722 = vsel %vm256, -inf, %v716
    %v723 = vsel %vm257, -inf, %v713
    %v724 = vsel %vm257, -inf, %v714
    %v725 = vsel %vm258, -inf, %v711
    %v726 = vsel %vm258, -inf, %v712
    %v727 = vmax.f32 %v695, %v719
    %v728 = vmax.f32 %v696, %v720
    %v729 = vmax.f32 %v697, %v721
    %v730 = vmax.f32 %v698, %v722
    %v731 = vmax.f32 %v699, %v723
    %v732 = vmax.f32 %v700, %v724
    %v733 = vmax.f32 %v701, %v725
    %v734 = vmax.f32 %v702, %v726
    %v735 = vrot.slane %v727, 6
    %v736 = vrot.slane %v728, 6
    %v737 = vrot.slane %v729, 6
    %v738 = vrot.slane %v730, 6
    %v739 = vrot.slane %v731, 6
    %v740 = vrot.slane %v732, 6
    %v741 = vrot.slane %v733, 6
    %v742 = vrot.slane %v734, 6
    %v743 = vsel %vm213, %v739, %v741
    %v744 = vsel %vm213, %v740, %v742
    %v745 = vsel %vm213, %v737, %v739
    %v746 = vsel %vm213, %v738, %v740
    %v747 = vsel %vm213, %v735, %v737
    %v748 = vsel %vm213, %v736, %v738
    %v749 = vsel %vm213, %v741, %v735
    %v750 = vsel %vm213, %v742, %v736
    %v751 = vsel %vm213, 0.0, %v749
    %v752 = vsel %vm213, 0.0, %v750
    %v753 = vsel %vm256, 0.0, %v747
    %v754 = vsel %vm256, 0.0, %v748
    %v755 = vsel %vm257, 0.0, %v745
    %v756 = vsel %vm257, 0.0, %v746
    %v757 = vsel %vm258, 0.0, %v743
    %v758 = vsel %vm258, 0.0, %v744
    %v759 = vpack.c.bf16 %v753, %v751
    %v760 = vpack.c.bf16 %v754, %v752
    %v761 = vpack.c.bf16 %v757, %v755
    %v762 = vpack.c.bf16 %v758, %v756
    %v763 = vpack.c.bf16 %v729, %v727
    %v764 = vpack.c.bf16 %v730, %v728
    %v765 = vpack.c.bf16 %v733, %v731
    %v766 = vpack.c.bf16 %v734, %v732
    %v767 = vrot.slane %v727, 2
    %v768 = vrot.slane %v728, 2
    %v769 = vrot.slane %v729, 2
    %v770 = vrot.slane %v730, 2
    %v771 = vrot.slane %v731, 2
    %v772 = vrot.slane %v732, 2
    %v773 = vrot.slane %v733, 2
    %v774 = vrot.slane %v734, 2
    %v775 = vsel %vm175, %v771, %v773
    %v776 = vsel %vm175, %v772, %v774
    %v777 = vsel %vm175, %v769, %v771
    %v778 = vsel %vm175, %v770, %v772
    %v779 = vsel %vm175, %v767, %v769
    %v780 = vsel %vm175, %v768, %v770
    %v781 = vsel %vm175, %v773, %v767
    %v782 = vsel %vm175, %v774, %v768
    %v783 = vsel %vm267, 0.0, %v779
    %v784 = vsel %vm267, 0.0, %v780
    %v785 = vsel %vm268, 0.0, %v777
    %v786 = vsel %vm268, 0.0, %v778
    %v787 = vsel %vm269, 0.0, %v775
    %v788 = vsel %vm269, 0.0, %v776
    %v789 = vsel %vm270, 0.0, %v781
    %v790 = vsel %vm270, 0.0, %v782
    %v791 = vpack.c.bf16 %v785, %v783
    %v792 = vpack.c.bf16 %v786, %v784
    %v793 = vpack.c.bf16 %v789, %v787
    %v794 = vpack.c.bf16 %v790, %v788
    %v795 = vld [vmem:[%s4] sm:$0xf]
    %v796 = vld [vmem:[%s4 + $0x4] sm:$0xf]
    %v797 = vld [vmem:[%s4 + $0x8] sm:$0xf]
    %v798 = vld [vmem:[%s4 + $0xc] sm:$0xf]
    %v799 = vld [vmem:[%s4 + $0x10] sm:$0xf]
    %v800 = vld [vmem:[%s4 + $0x14] sm:$0xf]
    %v801 = vld [vmem:[%s4 + $0x18] sm:$0xf]
    %v802 = vld [vmem:[%s4 + $0x1c] sm:$0xf]
    %v803 = vld [vmem:[%s4 + $0x20] sm:$0xf]
    %v804 = vld [vmem:[%s4 + $0x24] sm:$0xf]
    %v805 = vld [vmem:[%s4 + $0x28] sm:$0xf]
    %v806 = vld [vmem:[%s4 + $0x2c] sm:$0xf]
    %v807 = vld [vmem:[%s4 + $0x30] sm:$0xf]
    %v808 = vld [vmem:[%s4 + $0x34] sm:$0xf]
    %v809 = vld [vmem:[%s4 + $0x38] sm:$0xf]
    %v810 = vld [vmem:[%s4 + $0x3c] sm:$0xf]
    %v811 = vld [vmem:[%s4 + $0x40] sm:$0xf]
    %v812 = vld [vmem:[%s4 + $0x44] sm:$0xf]
    %v813 = vld [vmem:[%s4 + $0x48] sm:$0xf]
    %v814 = vld [vmem:[%s4 + $0x4c] sm:$0xf]
    %v815 = vld [vmem:[%s4 + $0x50] sm:$0xf]
    %v816 = vld [vmem:[%s4 + $0x54] sm:$0xf]
    %v817 = vld [vmem:[%s4 + $0x58] sm:$0xf]
    %v818 = vld [vmem:[%s4 + $0x5c] sm:$0xf]
    %v819 = vld [vmem:[%s4 + $0x60] sm:$0xf]
    %v820 = vld [vmem:[%s4 + $0x64] sm:$0xf]
    %v821 = vld [vmem:[%s4 + $0x68] sm:$0xf]
    %v822 = vld [vmem:[%s4 + $0x6c] sm:$0xf]
    %v823 = vld [vmem:[%s4 + $0x70] sm:$0xf]
    %v824 = vld [vmem:[%s4 + $0x74] sm:$0xf]
    %v825 = vld [vmem:[%s4 + $0x78] sm:$0xf]
    %v826 = vld [vmem:[%s4 + $0x7c] sm:$0xf]
    %v827 = vld [vmem:[%s4 + $0x80] sm:$0xf]
    %v828 = vld [vmem:[%s4 + $0x84] sm:$0xf]
    %v829 = vld [vmem:[%s4 + $0x88] sm:$0xf]
    %v830 = vld [vmem:[%s4 + $0x8c] sm:$0xf]
    %v831 = vld [vmem:[%s4 + $0x90] sm:$0xf]
    %v832 = vld [vmem:[%s4 + $0x94] sm:$0xf]
    %v833 = vld [vmem:[%s4 + $0x98] sm:$0xf]
    %v834 = vld [vmem:[%s4 + $0x9c] sm:$0xf]
    %v835 = vld [vmem:[%s4 + $0xa0] sm:$0xf]
    %v836 = vld [vmem:[%s4 + $0xa4] sm:$0xf]
    %v837 = vld [vmem:[%s4 + $0xa8] sm:$0xf]
    %v838 = vld [vmem:[%s4 + $0xac] sm:$0xf]
    %v839 = vld [vmem:[%s4 + $0xb0] sm:$0xf]
    %v840 = vld [vmem:[%s4 + $0xb4] sm:$0xf]
    %v841 = vld [vmem:[%s4 + $0xb8] sm:$0xf]
    %v842 = vld [vmem:[%s4 + $0xbc] sm:$0xf]
    %v843 = vld [vmem:[%s4 + $0xc0] sm:$0xf]
    %v844 = vld [vmem:[%s4 + $0xc4] sm:$0xf]
    %v845 = vld [vmem:[%s4 + $0xc8] sm:$0xf]
    %v846 = vld [vmem:[%s4 + $0xcc] sm:$0xf]
    %v847 = vld [vmem:[%s4 + $0xd0] sm:$0xf]
    %v848 = vld [vmem:[%s4 + $0xd4] sm:$0xf]
    %v849 = vld [vmem:[%s4 + $0xd8] sm:$0xf]
    %v850 = vld [vmem:[%s4 + $0xdc] sm:$0xf]
    %v851 = vld [vmem:[%s4 + $0xe0] sm:$0xf]
    %v852 = vld [vmem:[%s4 + $0xe4] sm:$0xf]
    %v853 = vld [vmem:[%s4 + $0xe8] sm:$0xf]
    %v854 = vld [vmem:[%s4 + $0xec] sm:$0xf]
    %v855 = vld [vmem:[%s4 + $0xf0] sm:$0xf]
    %v856 = vld [vmem:[%s4 + $0xf4] sm:$0xf]
    %v857 = vld [vmem:[%s4 + $0xf8] sm:$0xf]
    %v858 = vld [vmem:[%s4 + $0xfc] sm:$0xf]
    %v859 = vld [vmem:[%s4 + $0x100] sm:$0xf]
    %v860 = vld [vmem:[%s4 + $0x104] sm:$0xf]
    %v861 = vld [vmem:[%s4 + $0x108] sm:$0xf]
    %v862 = vld [vmem:[%s4 + $0x10c] sm:$0xf]
    %v863 = vld [vmem:[%s4 + $0x110] sm:$0xf]
    %v864 = vld [vmem:[%s4 + $0x114] sm:$0xf]
    %v865 = vld [vmem:[%s4 + $0x118] sm:$0xf]
    %v866 = vld [vmem:[%s4 + $0x11c] sm:$0xf]
    %v867 = vld [vmem:[%s4 + $0x120] sm:$0xf]
    %v868 = vld [vmem:[%s4 + $0x124] sm:$0xf]
    %v869 = vld [vmem:[%s4 + $0x128] sm:$0xf]
    %v870 = vld [vmem:[%s4 + $0x12c] sm:$0xf]
    %v871 = vld [vmem:[%s4 + $0x130] sm:$0xf]
    %v872 = vld [vmem:[%s4 + $0x134] sm:$0xf]
    %v873 = vld [vmem:[%s4 + $0x138] sm:$0xf]
    %v874 = vld [vmem:[%s4 + $0x13c] sm:$0xf]
    %v875 = vld [vmem:[%s4 + $0x140] sm:$0xf]
    %v876 = vld [vmem:[%s4 + $0x144] sm:$0xf]
    %v877 = vld [vmem:[%s4 + $0x148] sm:$0xf]
    %v878 = vld [vmem:[%s4 + $0x14c] sm:$0xf]
    %v879 = vld [vmem:[%s4 + $0x150] sm:$0xf]
    %v880 = vld [vmem:[%s4 + $0x154] sm:$0xf]
    %v881 = vld [vmem:[%s4 + $0x158] sm:$0xf]
    %v882 = vld [vmem:[%s4 + $0x15c] sm:$0xf]
    %v883 = vld [vmem:[%s4 + $0x160] sm:$0xf]
    %v884 = vld [vmem:[%s4 + $0x164] sm:$0xf]
    %v885 = vld [vmem:[%s4 + $0x168] sm:$0xf]
    %v886 = vld [vmem:[%s4 + $0x16c] sm:$0xf]
    %v887 = vld [vmem:[%s4 + $0x170] sm:$0xf]
    %v888 = vld [vmem:[%s4 + $0x174] sm:$0xf]
    %v889 = vld [vmem:[%s4 + $0x178] sm:$0xf]
    %v890 = vld [vmem:[%s4 + $0x17c] sm:$0xf]
    %v987 = vunpack.c.l.b16 %v795
    %v988 = vunpack.c.l.b16 %v796
    %v989 = vunpack.c.l.b16 %v797
    %v990 = vunpack.c.l.b16 %v798
    %v991 = vunpack.c.l.b16 %v799
    %v992 = vunpack.c.l.b16 %v800
    %v993 = vunpack.c.l.b16 %v801
    %v994 = vunpack.c.l.b16 %v802
    %v995 = vunpack.c.l.b16 %v803
    %v996 = vunpack.c.l.b16 %v804
    %v997 = vunpack.c.l.b16 %v805
    %v998 = vunpack.c.l.b16 %v806
    %v999 = vunpack.c.l.b16 %v807
    %v1000 = vunpack.c.l.b16 %v808
    %v1001 = vunpack.c.l.b16 %v809
    %v1002 = vunpack.c.l.b16 %v810
    %v1003 = vunpack.c.l.b16 %v811
    %v1004 = vunpack.c.l.b16 %v812
    %v1005 = vunpack.c.l.b16 %v813
    %v1006 = vunpack.c.l.b16 %v814
    %v1007 = vunpack.c.l.b16 %v815
    %v1008 = vunpack.c.l.b16 %v816
    %v1009 = vunpack.c.l.b16 %v817
    %v1010 = vunpack.c.l.b16 %v818
    %v1011 = vunpack.c.l.b16 %v819
    %v1012 = vunpack.c.l.b16 %v820
    %v1013 = vunpack.c.l.b16 %v821
    %v1014 = vunpack.c.l.b16 %v822
    %v1015 = vunpack.c.l.b16 %v823
    %v1016 = vunpack.c.l.b16 %v824
    %v1017 = vunpack.c.l.b16 %v825
    %v1018 = vunpack.c.l.b16 %v826
    %v1019 = vunpack.c.l.b16 %v827
    %v1020 = vunpack.c.l.b16 %v828
    %v1021 = vunpack.c.l.b16 %v829
    %v1022 = vunpack.c.l.b16 %v830
    %v1023 = vunpack.c.l.b16 %v831
    %v1024 = vunpack.c.l.b16 %v832
    %v1025 = vunpack.c.l.b16 %v833
    %v1026 = vunpack.c.l.b16 %v834
    %v1027 = vunpack.c.l.b16 %v835
    %v1028 = vunpack.c.l.b16 %v836
    %v1029 = vunpack.c.l.b16 %v837
    %v1030 = vunpack.c.l.b16 %v838
    %v1031 = vunpack.c.l.b16 %v839
    %v1032 = vunpack.c.l.b16 %v840
    %v1033 = vunpack.c.l.b16 %v841
    %v1034 = vunpack.c.l.b16 %v842
    %v1035 = vunpack.c.l.b16 %v843
    %v1036 = vunpack.c.l.b16 %v844
    %v1037 = vunpack.c.l.b16 %v845
    %v1038 = vunpack.c.l.b16 %v846
    %v1039 = vunpack.c.l.b16 %v847
    %v1040 = vunpack.c.l.b16 %v848
    %v1041 = vunpack.c.l.b16 %v849
    %v1042 = vunpack.c.l.b16 %v850
    %v1043 = vunpack.c.l.b16 %v851
    %v1044 = vunpack.c.l.b16 %v852
    %v1045 = vunpack.c.l.b16 %v853
    %v1046 = vunpack.c.l.b16 %v854
    %v1047 = vunpack.c.l.b16 %v855
    %v1048 = vunpack.c.l.b16 %v856
    %v1049 = vunpack.c.l.b16 %v857
    %v1050 = vunpack.c.l.b16 %v858
    %v1051 = vunpack.c.l.b16 %v859
    %v1052 = vunpack.c.l.b16 %v860
    %v1053 = vunpack.c.l.b16 %v861
    %v1054 = vunpack.c.l.b16 %v862
    %v1055 = vunpack.c.l.b16 %v863
    %v1056 = vunpack.c.l.b16 %v864
    %v1057 = vunpack.c.l.b16 %v865
    %v1058 = vunpack.c.l.b16 %v866
    %v1059 = vunpack.c.l.b16 %v867
    %v1060 = vunpack.c.l.b16 %v868
    %v1061 = vunpack.c.l.b16 %v869
    %v1062 = vunpack.c.l.b16 %v870
    %v1063 = vunpack.c.l.b16 %v871
    %v1064 = vunpack.c.l.b16 %v872
    %v1065 = vunpack.c.l.b16 %v873
    %v1066 = vunpack.c.l.b16 %v874
    %v1067 = vunpack.c.l.b16 %v875
    %v1068 = vunpack.c.l.b16 %v876
    %v1069 = vunpack.c.l.b16 %v877
    %v1070 = vunpack.c.l.b16 %v878
    %v1071 = vunpack.c.l.b16 %v879
    %v1072 = vunpack.c.l.b16 %v880
    %v1073 = vunpack.c.l.b16 %v881
    %v1074 = vunpack.c.l.b16 %v882
    %v1075 = vunpack.c.l.b16 %v883
    %v1076 = vunpack.c.l.b16 %v884
    %v1077 = vunpack.c.l.b16 %v885
    %v1078 = vunpack.c.l.b16 %v886
    %v1079 = vunpack.c.l.b16 %v887
    %v1080 = vunpack.c.l.b16 %v888
    %v1081 = vunpack.c.l.b16 %v889
    %v1082 = vunpack.c.l.b16 %v890
    %v1083 = vpack.c.b16 %v988, %v987
    %v1084 = vpack.c.b16 %v990, %v989
    %v1085 = vpack.c.b16 %v992, %v991
    %v1086 = vpack.c.b16 %v994, %v993
    %v1087 = vpack.c.b16 %v996, %v995
    %v1088 = vpack.c.b16 %v998, %v997
    %v1089 = vpack.c.b16 %v1000, %v999
    %v1090 = vpack.c.b16 %v1002, %v1001
    %v1091 = vpack.c.b16 %v1004, %v1003
    %v1092 = vpack.c.b16 %v1006, %v1005
    %v1093 = vpack.c.b16 %v1008, %v1007
    %v1094 = vpack.c.b16 %v1010, %v1009
    %v1095 = vpack.c.b16 %v1012, %v1011
    %v1096 = vpack.c.b16 %v1014, %v1013
    %v1097 = vpack.c.b16 %v1016, %v1015
    %v1098 = vpack.c.b16 %v1018, %v1017
    %v1099 = vpack.c.b16 %v1020, %v1019
    %v1100 = vpack.c.b16 %v1022, %v1021
    %v1101 = vpack.c.b16 %v1024, %v1023
    %v1102 = vpack.c.b16 %v1026, %v1025
    %v1103 = vpack.c.b16 %v1028, %v1027
    %v1104 = vpack.c.b16 %v1030, %v1029
    %v1105 = vpack.c.b16 %v1032, %v1031
    %v1106 = vpack.c.b16 %v1034, %v1033
    %v1107 = vpack.c.b16 %v1036, %v1035
    %v1108 = vpack.c.b16 %v1038, %v1037
    %v1109 = vpack.c.b16 %v1040, %v1039
    %v1110 = vpack.c.b16 %v1042, %v1041
    %v1111 = vpack.c.b16 %v1044, %v1043
    %v1112 = vpack.c.b16 %v1046, %v1045
    %v1113 = vpack.c.b16 %v1048, %v1047
    %v1114 = vpack.c.b16 %v1050, %v1049
    %v1115 = vpack.c.b16 %v1052, %v1051
    %v1116 = vpack.c.b16 %v1054, %v1053
    %v1117 = vpack.c.b16 %v1056, %v1055
    %v1118 = vpack.c.b16 %v1058, %v1057
    %v1119 = vpack.c.b16 %v1060, %v1059
    %v1120 = vpack.c.b16 %v1062, %v1061
    %v1121 = vpack.c.b16 %v1064, %v1063
    %v1122 = vpack.c.b16 %v1066, %v1065
    %v1123 = vpack.c.b16 %v1068, %v1067
    %v1124 = vpack.c.b16 %v1070, %v1069
    %v1125 = vpack.c.b16 %v1072, %v1071
    %v1126 = vpack.c.b16 %v1074, %v1073
    %v1127 = vpack.c.b16 %v1076, %v1075
    %v1128 = vpack.c.b16 %v1078, %v1077
    %v1129 = vpack.c.b16 %v1080, %v1079
    %v1130 = vpack.c.b16 %v1082, %v1081
    %1179 = vmatprep.subr.bf16.mxu0 0
    %1180 = vmatpush1.bf16.msra.mxu0 %v1090
    %1181 = vmatprep.subr.bf16.mxu0 0
    %1182 = vmatpush1.bf16.msra.mxu0 %v1089
    %1183 = vmatprep.subr.bf16.mxu0 0
    %1184 = vmatpush1.bf16.msra.mxu0 %v1088
    %1185 = vmatprep.subr.bf16.mxu0 0
    %1186 = vmatpush1.bf16.msra.mxu0 %v1087
    %1187 = vmatprep.subr.bf16.mxu0 0
    %1188 = vmatpush1.bf16.msra.mxu0 %v1086
    %1189 = vmatprep.subr.bf16.mxu0 0
    %1190 = vmatpush1.bf16.msra.mxu0 %v1085
    %1191 = vmatprep.subr.bf16.mxu0 0
    %1192 = vmatpush1.bf16.msra.mxu0 %v1084
    %1193 = vmatprep.subr.bf16.mxu0 0
    %1194 = vmatpush1.bf16.msra.mxu0 %v1083
    %1195 = vmatprep.subr.bf16.mxu0 0
    %1196 = vmatpush2.bf16.msra.mxu0 %v1098
    %1197 = vmatprep.subr.bf16.mxu0 0
    %1198 = vmatpush2.bf16.msra.mxu0 %v1097
    %1199 = vmatprep.subr.bf16.mxu0 0
    %1200 = vmatpush2.bf16.msra.mxu0 %v1096
    %1201 = vmatprep.subr.bf16.mxu0 0
    %1202 = vmatpush2.bf16.msra.mxu0 %v1095
    %1203 = vmatprep.subr.bf16.mxu0 0
    %1204 = vmatpush2.bf16.msra.mxu0 %v1094
    %1205 = vmatprep.subr.bf16.mxu0 0
    %1206 = vmatpush2.bf16.msra.mxu0 %v1093
    %1207 = vmatprep.subr.bf16.mxu0 0
    %1208 = vmatpush2.bf16.msra.mxu0 %v1092
    %1209 = vmatprep.subr.bf16.mxu0 0
    %1210 = vmatpush2.bf16.msra.mxu0 %v1091
    %1211 = vmatprep.mubr.bf16.mxu0 %v760
    %1212 = vmatmul.mubr.bf16.gmra.mxu0 %v759
    %v1213 = vpop.f32.mrf.mxu0
    %v1214 = vadd.f32 0.0, %v1213
    %v1215 = vpop.f32.mrf.mxu0
    %v1216 = vpop.f32.mrf.mxu0
    %v1217 = vadd.f32 0.0, %v1216
    %v1218 = vpop.f32.mrf.mxu0
    %1219 = vmatprep.mubr.bf16.mxu0 %v762
    %1220 = vmatmul.mubr.bf16.gmra.mxu0 %v761
    %v1221 = vpop.f32.mrf.mxu0
    %v1222 = vadd.f32 0.0, %v1221
    %v1223 = vpop.f32.mrf.mxu0
    %v1224 = vpop.f32.mrf.mxu0
    %v1225 = vadd.f32 0.0, %v1224
    %v1226 = vpop.f32.mrf.mxu0
    %1227 = vdwg.mxu0
    %1228 = vmatprep.subr.bf16.mxu0 0
    %1229 = vmatpush1.bf16.msra.mxu0 %v1106
    %1230 = vmatprep.subr.bf16.mxu0 0
    %1231 = vmatpush1.bf16.msra.mxu0 %v1105
    %1232 = vmatprep.subr.bf16.mxu0 0
    %1233 = vmatpush1.bf16.msra.mxu0 %v1104
    %1234 = vmatprep.subr.bf16.mxu0 0
    %1235 = vmatpush1.bf16.msra.mxu0 %v1103
    %1236 = vmatprep.subr.bf16.mxu0 0
    %1237 = vmatpush1.bf16.msra.mxu0 %v1102
    %1238 = vmatprep.subr.bf16.mxu0 0
    %1239 = vmatpush1.bf16.msra.mxu0 %v1101
    %1240 = vmatprep.subr.bf16.mxu0 0
    %1241 = vmatpush1.bf16.msra.mxu0 %v1100
    %1242 = vmatprep.subr.bf16.mxu0 0
    %1243 = vmatpush1.bf16.msra.mxu0 %v1099
    %1244 = vmatprep.subr.bf16.mxu0 0
    %1245 = vmatpush2.bf16.msra.mxu0 %v1114
    %1246 = vmatprep.subr.bf16.mxu0 0
    %1247 = vmatpush2.bf16.msra.mxu0 %v1113
    %1248 = vmatprep.subr.bf16.mxu0 0
    %1249 = vmatpush2.bf16.msra.mxu0 %v1112
    %1250 = vmatprep.subr.bf16.mxu0 0
    %1251 = vmatpush2.bf16.msra.mxu0 %v1111
    %1252 = vmatprep.subr.bf16.mxu0 0
    %1253 = vmatpush2.bf16.msra.mxu0 %v1110
    %1254 = vmatprep.subr.bf16.mxu0 0
    %1255 = vmatpush2.bf16.msra.mxu0 %v1109
    %1256 = vmatprep.subr.bf16.mxu0 0
    %1257 = vmatpush2.bf16.msra.mxu0 %v1108
    %1258 = vmatprep.subr.bf16.mxu0 0
    %1259 = vmatpush2.bf16.msra.mxu0 %v1107
    %1260 = vmatprep.mubr.bf16.mxu0 %v764
    %1261 = vmatmul.mubr.bf16.gmra.mxu0 %v763
    %v1262 = vpop.f32.mrf.mxu0
    %v1263 = vadd.f32 %v1214, %v1262
    %v1264 = vpop.f32.mrf.mxu0
    %v1265 = vpop.f32.mrf.mxu0
    %v1266 = vadd.f32 %v1217, %v1265
    %v1267 = vpop.f32.mrf.mxu0
    %1268 = vmatprep.mubr.bf16.mxu0 %v766
    %1269 = vmatmul.mubr.bf16.gmra.mxu0 %v765
    %v1270 = vpop.f32.mrf.mxu0
    %v1271 = vadd.f32 %v1222, %v1270
    %v1272 = vpop.f32.mrf.mxu0
    %v1273 = vpop.f32.mrf.mxu0
    %v1274 = vadd.f32 %v1225, %v1273
    %v1275 = vpop.f32.mrf.mxu0
    %1276 = vdwg.mxu0
    %1277 = vmatprep.subr.bf16.mxu0 0
    %1278 = vmatpush1.bf16.msra.mxu0 %v1122
    %1279 = vmatprep.subr.bf16.mxu0 0
    %1280 = vmatpush1.bf16.msra.mxu0 %v1121
    %1281 = vmatprep.subr.bf16.mxu0 0
    %1282 = vmatpush1.bf16.msra.mxu0 %v1120
    %1283 = vmatprep.subr.bf16.mxu0 0
    %1284 = vmatpush1.bf16.msra.mxu0 %v1119
    %1285 = vmatprep.subr.bf16.mxu0 0
    %1286 = vmatpush1.bf16.msra.mxu0 %v1118
    %1287 = vmatprep.subr.bf16.mxu0 0
    %1288 = vmatpush1.bf16.msra.mxu0 %v1117
    %1289 = vmatprep.subr.bf16.mxu0 0
    %1290 = vmatpush1.bf16.msra.mxu0 %v1116
    %1291 = vmatprep.subr.bf16.mxu0 0
    %1292 = vmatpush1.bf16.msra.mxu0 %v1115
    %1293 = vmatprep.subr.bf16.mxu0 0
    %1294 = vmatpush2.bf16.msra.mxu0 %v1130
    %1295 = vmatprep.subr.bf16.mxu0 0
    %1296 = vmatpush2.bf16.msra.mxu0 %v1129
    %1297 = vmatprep.subr.bf16.mxu0 0
    %1298 = vmatpush2.bf16.msra.mxu0 %v1128
    %1299 = vmatprep.subr.bf16.mxu0 0
    %1300 = vmatpush2.bf16.msra.mxu0 %v1127
    %1301 = vmatprep.subr.bf16.mxu0 0
    %1302 = vmatpush2.bf16.msra.mxu0 %v1126
    %1303 = vmatprep.subr.bf16.mxu0 0
    %1304 = vmatpush2.bf16.msra.mxu0 %v1125
    %1305 = vmatprep.subr.bf16.mxu0 0
    %1306 = vmatpush2.bf16.msra.mxu0 %v1124
    %1307 = vmatprep.subr.bf16.mxu0 0
    %1308 = vmatpush2.bf16.msra.mxu0 %v1123
    %1309 = vmatprep.mubr.bf16.mxu0 %v792
    %1310 = vmatmul.mubr.bf16.gmra.mxu0 %v791
    %v1311 = vpop.f32.mrf.mxu0
    %v1312 = vadd.f32 %v1263, %v1311
    %v1313 = vpop.f32.mrf.mxu0
    %v1314 = vpop.f32.mrf.mxu0
    %v1315 = vadd.f32 %v1266, %v1314
    %v1316 = vpop.f32.mrf.mxu0
    %1317 = vmatprep.mubr.bf16.mxu0 %v794
    %1318 = vmatmul.mubr.bf16.gmra.mxu0 %v793
    %v1319 = vpop.f32.mrf.mxu0
    %v1320 = vadd.f32 %v1271, %v1319
    %v1321 = vpop.f32.mrf.mxu0
    %v1322 = vpop.f32.mrf.mxu0
    %v1323 = vadd.f32 %v1274, %v1322
    %v1324 = vpop.f32.mrf.mxu0
    %1325 = vdwg.mxu0
    %v1326 = vld [vmem:[%s5] sm:$0x1]
    %v1328 = vlaneseq
    %v1329 = vshrl.u32 %v1328, 7
    %v1330 = vsub.s32 0, %v1329
    %v1331 = vrot.slane %v1326, %v1330
    %v1333 = vmul.f32 %v1312, %v1331
    %v1334 = vmul.f32 %v1315, %v1331
    %v1335 = vmul.f32 %v1320, %v1331
    %v1336 = vmul.f32 %v1323, %v1331
    %v1337 = vld [vmem:[%s6] sm:$0x1]
    %v1339 = vlaneseq
    %v1340 = vshrl.u32 %v1339, 7
    %v1341 = vsub.s32 0, %v1340
    %v1342 = vrot.slane %v1337, %v1341
    %v1344 = vadd.f32 %v1333, %v1342
    %v1345 = vadd.f32 %v1334, %v1342
    %v1346 = vadd.f32 %v1335, %v1342
    %v1347 = vadd.f32 %v1336, %v1342
    %v1348 = vmax.f32 %v1344, 0.0
    %v1349 = vmax.f32 %v1345, 0.0
    %v1350 = vmax.f32 %v1346, 0.0
    %v1351 = vmax.f32 %v1347, 0.0
    %v1352 = vrot.slane %v1348, 6
    %v1353 = vrot.slane %v1349, 6
    %v1354 = vrot.slane %v1350, 6
    %v1355 = vrot.slane %v1351, 6
    %v1356 = vsel %vm213, %v1354, %v1355
    %v1357 = vsel %vm213, %v1353, %v1354
    %v1358 = vsel %vm213, %v1352, %v1353
    %v1359 = vsel %vm213, %v1355, %v1352
    %v1360 = vsel %vm213, 0.0, %v1359
    %v1361 = vsel %vm256, 0.0, %v1358
    %v1362 = vsel %vm257, 0.0, %v1357
    %v1363 = vsel %vm258, 0.0, %v1356
    %v1364 = vpack.c.bf16 %v1361, %v1360
    %v1365 = vpack.c.bf16 %v1363, %v1362
    %v1366 = vpack.c.bf16 %v1349, %v1348
    %v1367 = vpack.c.bf16 %v1351, %v1350
    %v1368 = vrot.slane %v1348, 2
    %v1369 = vrot.slane %v1349, 2
    %v1370 = vrot.slane %v1350, 2
    %v1371 = vrot.slane %v1351, 2
    %v1372 = vsel %vm175, %v1370, %v1371
    %v1373 = vsel %vm175, %v1369, %v1370
    %v1374 = vsel %vm175, %v1368, %v1369
    %v1375 = vsel %vm175, %v1371, %v1368
    %v1376 = vsel %vm267, 0.0, %v1374
    %v1377 = vsel %vm268, 0.0, %v1373
    %v1378 = vsel %vm269, 0.0, %v1372
    %v1379 = vsel %vm270, 0.0, %v1375
    %v1380 = vpack.c.bf16 %v1377, %v1376
    %v1381 = vpack.c.bf16 %v1379, %v1378
    %1384 = vrot.lane.b32.xlu0 %v1366, 16
    %v1385 = vpop.permute.xlu0 %1384
    %1386 = vrot.lane.b32.xlu0 %v1367, 16
    %v1387 = vpop.permute.xlu0 %1386
    %1390 = vrot.lane.b32.xlu0 %v1380, 32
    %v1391 = vpop.permute.xlu0 %1390
    %1392 = vrot.lane.b32.xlu0 %v1381, 32
    %v1393 = vpop.permute.xlu0 %1392
    %v1396 = vsel %vm434, %v1364, %v1385
    %v1399 = vsel %vm434, %v1365, %v1387
    %v1401 = vsel %vm444, %v1396, %v1391
    %v1403 = vsel %vm444, %v1399, %v1393
    %v1404 = vld [vmem:[%s7] sm:$0xf]
    %v1405 = vld [vmem:[%s7 + $0x4] sm:$0xf]
    %v1406 = vld [vmem:[%s7 + $0x8] sm:$0xf]
    %v1407 = vld [vmem:[%s7 + $0xc] sm:$0xf]
    %v1408 = vld [vmem:[%s7 + $0x10] sm:$0xf]
    %v1409 = vld [vmem:[%s7 + $0x14] sm:$0xf]
    %v1416 = vunpack.c.l.b16 %v1404
    %v1417 = vunpack.c.l.b16 %v1405
    %v1418 = vunpack.c.l.b16 %v1406
    %v1419 = vunpack.c.l.b16 %v1407
    %v1420 = vunpack.c.l.b16 %v1408
    %v1421 = vunpack.c.l.b16 %v1409
    %v1422 = vpack.c.b16 %v1417, %v1416
    %v1423 = vpack.c.b16 %v1419, %v1418
    %v1424 = vpack.c.b16 %v1421, %v1420
    %v1428 = vsel %vm454, %v1401, 0
    %v1430 = vsel %vm454, %v1403, 0
    %1432 = vmatprep.subr.bf16.mxu0 0
    %1433 = vmatpush1.bf16.msra.mxu0 0
    %1434 = vmatprep.subr.bf16.mxu0 0
    %1435 = vmatpush1.bf16.msra.mxu0 0
    %1436 = vmatprep.subr.bf16.mxu0 0
    %1437 = vmatpush1.bf16.msra.mxu0 0
    %1438 = vmatprep.subr.bf16.mxu0 0
    %1439 = vmatpush1.bf16.msra.mxu0 0
    %1440 = vmatprep.subr.bf16.mxu0 0
    %1441 = vmatpush1.bf16.msra.mxu0 0
    %1442 = vmatprep.subr.bf16.mxu0 0
    %1443 = vmatpush1.bf16.msra.mxu0 %v1424
    %1444 = vmatprep.subr.bf16.mxu0 0
    %1445 = vmatpush1.bf16.msra.mxu0 %v1423
    %1446 = vmatprep.subr.bf16.mxu0 0
    %1447 = vmatpush1.bf16.msra.mxu0 %v1422
    %1448 = vmatprep.subr.bf16.mxu0 0
    %1449 = vmatpush2.bf16.msra.mxu0 0
    %1450 = vmatprep.subr.bf16.mxu0 0
    %1451 = vmatpush2.bf16.msra.mxu0 0
    %1452 = vmatprep.subr.bf16.mxu0 0
    %1453 = vmatpush2.bf16.msra.mxu0 0
    %1454 = vmatprep.subr.bf16.mxu0 0
    %1455 = vmatpush2.bf16.msra.mxu0 0
    %1456 = vmatprep.subr.bf16.mxu0 0
    %1457 = vmatpush2.bf16.msra.mxu0 0
    %1458 = vmatprep.subr.bf16.mxu0 0
    %1459 = vmatpush2.bf16.msra.mxu0 0
    %1460 = vmatprep.subr.bf16.mxu0 0
    %1461 = vmatpush2.bf16.msra.mxu0 0
    %1462 = vmatprep.subr.bf16.mxu0 0
    %1463 = vmatpush2.bf16.msra.mxu0 0
    %1464 = vmatprep.mubr.bf16.mxu0 0
    %1465 = vmatmul.mubr.bf16.gmra.mxu0 %v1428
    %v1466 = vpop.f32.mrf.mxu0
    %v1467 = vadd.f32 0.0, %v1466
    %v1468 = vpop.f32.mrf.mxu0
    %v1469 = vpop.f32.mrf.mxu0
    %v1470 = vadd.f32 0.0, %v1469
    %v1471 = vpop.f32.mrf.mxu0
    %1472 = vmatprep.mubr.bf16.mxu0 0
    %1473 = vmatmul.mubr.bf16.gmra.mxu0 %v1430
    %v1474 = vpop.f32.mrf.mxu0
    %v1475 = vadd.f32 0.0, %v1474
    %v1476 = vpop.f32.mrf.mxu0
    %v1477 = vpop.f32.mrf.mxu0
    %v1478 = vadd.f32 0.0, %v1477
    %v1479 = vpop.f32.mrf.mxu0
    %1480 = vdwg.mxu0
    %v1481 = vld [vmem:[%s8] sm:$0x1]
    %v1483 = vlaneseq
    %v1484 = vshrl.u32 %v1483, 7
    %v1485 = vsub.s32 0, %v1484
    %v1486 = vrot.slane %v1481, %v1485
    %v1488 = vmul.f32 %v1467, %v1486
    %v1489 = vmul.f32 %v1470, %v1486
    %v1490 = vmul.f32 %v1475, %v1486
    %v1491 = vmul.f32 %v1478, %v1486
    %v1492 = vld [vmem:[%s9] sm:$0x1]
    %v1494 = vlaneseq
    %v1495 = vshrl.u32 %v1494, 7
    %v1496 = vsub.s32 0, %v1495
    %v1497 = vrot.slane %v1492, %v1496
    %v1499 = vadd.f32 %v1488, %v1497
    %v1500 = vadd.f32 %v1489, %v1497
    %v1501 = vadd.f32 %v1490, %v1497
    %v1502 = vadd.f32 %v1491, %v1497
    %v1503 = vadd.f32 %v1499, %v100
    %v1504 = vadd.f32 %v1500, %v117
    %v1505 = vadd.f32 %v1501, %v134
    %v1506 = vadd.f32 %v1502, %v151
    %v1507 = vpack.c.bf16 %v1504, %v1503
    %v1508 = vpack.c.bf16 %v1506, %v1505
    %v1509 = vld [vmem:[%s10] sm:$0xf]
    %v1510 = vld [vmem:[%s11] sm:$0x1]
    %v1512 = vlaneseq
    %v1513 = vshrl.u32 %v1512, 7
    %v1514 = vsub.s32 0, %v1513
    %v1515 = vrot.slane %v1510, %v1514
    %v1518 = vsel %vm427, %v1507, 0
    %v1521 = vsel %vm427, %v1508, 0
    %vm1523 = vcmask 1043456
    %v1525 = vsel %vm1523, %v1509, 0
    %1527 = vmatprep.subr.bf16.mxu0 0
    %1528 = vmatpush1.bf16.msra.mxu0 0
    %1529 = vmatprep.subr.bf16.mxu0 0
    %1530 = vmatpush1.bf16.msra.mxu0 0
    %1531 = vmatprep.subr.bf16.mxu0 0
    %1532 = vmatpush1.bf16.msra.mxu0 0
    %1533 = vmatprep.subr.bf16.mxu0 0
    %1534 = vmatpush1.bf16.msra.mxu0 0
    %1535 = vmatprep.subr.bf16.mxu0 0
    %1536 = vmatpush1.bf16.msra.mxu0 0
    %1537 = vmatprep.subr.bf16.mxu0 0
    %1538 = vmatpush1.bf16.msra.mxu0 0
    %1539 = vmatprep.subr.bf16.mxu0 0
    %1540 = vmatpush1.bf16.msra.mxu0 0
    %1541 = vmatprep.subr.bf16.mxu0 0
    %1542 = vmatpush1.bf16.msra.mxu0 %v1525
    %1543 = vmatprep.subr.bf16.mxu0 0
    %1544 = vmatpush2.bf16.msra.mxu0 0
    %1545 = vmatprep.subr.bf16.mxu0 0
    %1546 = vmatpush2.bf16.msra.mxu0 0
    %1547 = vmatprep.subr.bf16.mxu0 0
    %1548 = vmatpush2.bf16.msra.mxu0 0
    %1549 = vmatprep.subr.bf16.mxu0 0
    %1550 = vmatpush2.bf16.msra.mxu0 0
    %1551 = vmatprep.subr.bf16.mxu0 0
    %1552 = vmatpush2.bf16.msra.mxu0 0
    %1553 = vmatprep.subr.bf16.mxu0 0
    %1554 = vmatpush2.bf16.msra.mxu0 0
    %1555 = vmatprep.subr.bf16.mxu0 0
    %1556 = vmatpush2.bf16.msra.mxu0 0
    %1557 = vmatprep.subr.bf16.mxu0 0
    %1558 = vmatpush2.bf16.msra.mxu0 0
    %1559 = vmatprep.mubr.bf16.mxu0 0
    %1560 = vmatmul.mubr.bf16.gmra.mxu0 %v1518
    %v1561 = vpop.f32.mrf.mxu0
    %v1562 = vadd.f32 %v1515, %v1561
    %v1563 = vpop.f32.mrf.mxu0
    %v1564 = vpop.f32.mrf.mxu0
    %v1565 = vadd.f32 %v1515, %v1564
    %v1566 = vpop.f32.mrf.mxu0
    %1567 = vmatprep.mubr.bf16.mxu0 0
    %1568 = vmatmul.mubr.bf16.gmra.mxu0 %v1521
    %v1569 = vpop.f32.mrf.mxu0
    %v1570 = vadd.f32 %v1515, %v1569
    %v1571 = vpop.f32.mrf.mxu0
    %v1572 = vpop.f32.mrf.mxu0
    %v1573 = vadd.f32 %v1515, %v1572
    %v1574 = vpop.f32.mrf.mxu0
    %1575 = vdwg.mxu0
    %v1576 = vmax.f32 %v1562, 0.0
    %v1577 = vmax.f32 %v1565, 0.0
    %v1578 = vmax.f32 %v1570, 0.0
    %v1579 = vmax.f32 %v1573, 0.0
    %v1580 = vxor.u32 %v1562, 2147483648
    %v1581 = vxor.u32 %v1565, 2147483648
    %v1582 = vxor.u32 %v1570, 2147483648
    %v1583 = vxor.u32 %v1573, 2147483648
    %v1584 = vmul.f32 %v1580, 1.442695
    %v1585 = vpow.pop %v1584
    %v1586 = vmul.f32 %v1581, 1.442695
    %v1587 = vpow.pop %v1586
    %v1588 = vmul.f32 %v1582, 1.442695
    %v1589 = vpow.pop %v1588
    %v1590 = vmul.f32 %v1583, 1.442695
    %v1591 = vpow.pop %v1590
    %v1592 = vadd.f32 %v1585, 1.0
    %v1593 = vadd.f32 %v1587, 1.0
    %v1594 = vadd.f32 %v1589, 1.0
    %v1595 = vadd.f32 %v1591, 1.0
    %v1596 = vrcp.pop %v1592
    %v1597 = vmul.f32 1.0, %v1596
    %v1598 = vrcp.pop %v1593
    %v1599 = vmul.f32 1.0, %v1598
    %v1600 = vrcp.pop %v1594
    %v1601 = vmul.f32 1.0, %v1600
    %v1602 = vrcp.pop %v1595
    %v1603 = vmul.f32 1.0, %v1602
    %1608 = vrot.lane.b32.xlu0 %v1597, 120
    %v1609 = vpop.permute.xlu0 %1608
    %1610 = vrot.lane.b32.xlu0 %v1599, 120
    %v1611 = vpop.permute.xlu0 %1610
    %1612 = vrot.lane.b32.xlu0 %v1601, 120
    %v1613 = vpop.permute.xlu0 %1612
    %1614 = vrot.lane.b32.xlu0 %v1603, 120
    %v1615 = vpop.permute.xlu0 %1614
    %v1620 = vmul.f32 %v1576, %v1609
    %v1621 = vmul.f32 %v1577, %v1611
    %v1622 = vmul.f32 %v1578, %v1613
    %v1623 = vmul.f32 %v1579, %v1615
    %v1624 = vsub.f32 1.0, %v1597
    %v1625 = vsub.f32 1.0, %v1599
    %v1626 = vsub.f32 1.0, %v1601
    %v1627 = vsub.f32 1.0, %v1603
    %1632 = vrot.lane.b32.xlu0 %v1624, 120
    %v1633 = vpop.permute.xlu0 %1632
    %1634 = vrot.lane.b32.xlu0 %v1625, 120
    %v1635 = vpop.permute.xlu0 %1634
    %1636 = vrot.lane.b32.xlu0 %v1626, 120
    %v1637 = vpop.permute.xlu0 %1636
    %1638 = vrot.lane.b32.xlu0 %v1627, 120
    %v1639 = vpop.permute.xlu0 %1638
    %v1644 = vmul.f32 %v1503, %v1633
    %v1645 = vmul.f32 %v1504, %v1635
    %v1646 = vmul.f32 %v1505, %v1637
    %v1647 = vmul.f32 %v1506, %v1639
    %v1648 = vadd.f32 %v1620, %v1644
    %v1649 = vadd.f32 %v1621, %v1645
    %v1650 = vadd.f32 %v1622, %v1646
    %v1651 = vadd.f32 %v1623, %v1647
    %v1652 = vpack.c.bf16 %v1649, %v1648
    %v1653 = vpack.c.bf16 %v1651, %v1650
    %s1654 = scalar_lea.vmem %s10, 4
    %v1655 = vld [vmem:[%s1654] sm:$0xf]
    %s1656 = scalar_lea.vmem %s11, 1
    %v1657 = vld [vmem:[%s1656] sm:$0x1]
    %v1659 = vlaneseq
    %v1660 = vshrl.u32 %v1659, 7
    %v1661 = vsub.s32 0, %v1660
    %v1662 = vrot.slane %v1657, %v1661
    %v1665 = vsel %vm427, %v1652, 0
    %v1668 = vsel %vm427, %v1653, 0
    %v1671 = vsel %vm1523, %v1655, 0
    %1673 = vmatprep.subr.bf16.mxu0 0
    %1674 = vmatpush1.bf16.msra.mxu0 0
    %1675 = vmatprep.subr.bf16.mxu0 0
    %1676 = vmatpush1.bf16.msra.mxu0 0
    %1677 = vmatprep.subr.bf16.mxu0 0
    %1678 = vmatpush1.bf16.msra.mxu0 0
    %1679 = vmatprep.subr.bf16.mxu0 0
    %1680 = vmatpush1.bf16.msra.mxu0 0
    %1681 = vmatprep.subr.bf16.mxu0 0
    %1682 = vmatpush1.bf16.msra.mxu0 0
    %1683 = vmatprep.subr.bf16.mxu0 0
    %1684 = vmatpush1.bf16.msra.mxu0 0
    %1685 = vmatprep.subr.bf16.mxu0 0
    %1686 = vmatpush1.bf16.msra.mxu0 0
    %1687 = vmatprep.subr.bf16.mxu0 0
    %1688 = vmatpush1.bf16.msra.mxu0 %v1671
    %1689 = vmatprep.subr.bf16.mxu0 0
    %1690 = vmatpush2.bf16.msra.mxu0 0
    %1691 = vmatprep.subr.bf16.mxu0 0
    %1692 = vmatpush2.bf16.msra.mxu0 0
    %1693 = vmatprep.subr.bf16.mxu0 0
    %1694 = vmatpush2.bf16.msra.mxu0 0
    %1695 = vmatprep.subr.bf16.mxu0 0
    %1696 = vmatpush2.bf16.msra.mxu0 0
    %1697 = vmatprep.subr.bf16.mxu0 0
    %1698 = vmatpush2.bf16.msra.mxu0 0
    %1699 = vmatprep.subr.bf16.mxu0 0
    %1700 = vmatpush2.bf16.msra.mxu0 0
    %1701 = vmatprep.subr.bf16.mxu0 0
    %1702 = vmatpush2.bf16.msra.mxu0 0
    %1703 = vmatprep.subr.bf16.mxu0 0
    %1704 = vmatpush2.bf16.msra.mxu0 0
    %1705 = vmatprep.mubr.bf16.mxu0 0
    %1706 = vmatmul.mubr.bf16.gmra.mxu0 %v1665
    %v1707 = vpop.f32.mrf.mxu0
    %v1708 = vadd.f32 %v1662, %v1707
    %v1709 = vpop.f32.mrf.mxu0
    %v1710 = vpop.f32.mrf.mxu0
    %v1711 = vadd.f32 %v1662, %v1710
    %v1712 = vpop.f32.mrf.mxu0
    %1713 = vmatprep.mubr.bf16.mxu0 0
    %1714 = vmatmul.mubr.bf16.gmra.mxu0 %v1668
    %v1715 = vpop.f32.mrf.mxu0
    %v1716 = vadd.f32 %v1662, %v1715
    %v1717 = vpop.f32.mrf.mxu0
    %v1718 = vpop.f32.mrf.mxu0
    %v1719 = vadd.f32 %v1662, %v1718
    %v1720 = vpop.f32.mrf.mxu0
    %1721 = vdwg.mxu0
    %v1722 = vmax.f32 %v1708, 0.0
    %v1723 = vmax.f32 %v1711, 0.0
    %v1724 = vmax.f32 %v1716, 0.0
    %v1725 = vmax.f32 %v1719, 0.0
    %v1726 = vxor.u32 %v1708, 2147483648
    %v1727 = vxor.u32 %v1711, 2147483648
    %v1728 = vxor.u32 %v1716, 2147483648
    %v1729 = vxor.u32 %v1719, 2147483648
    %v1730 = vmul.f32 %v1726, 1.442695
    %v1731 = vpow.pop %v1730
    %v1732 = vmul.f32 %v1727, 1.442695
    %v1733 = vpow.pop %v1732
    %v1734 = vmul.f32 %v1728, 1.442695
    %v1735 = vpow.pop %v1734
    %v1736 = vmul.f32 %v1729, 1.442695
    %v1737 = vpow.pop %v1736
    %v1738 = vadd.f32 %v1731, 1.0
    %v1739 = vadd.f32 %v1733, 1.0
    %v1740 = vadd.f32 %v1735, 1.0
    %v1741 = vadd.f32 %v1737, 1.0
    %v1742 = vrcp.pop %v1738
    %v1743 = vmul.f32 1.0, %v1742
    %v1744 = vrcp.pop %v1739
    %v1745 = vmul.f32 1.0, %v1744
    %v1746 = vrcp.pop %v1740
    %v1747 = vmul.f32 1.0, %v1746
    %v1748 = vrcp.pop %v1741
    %v1749 = vmul.f32 1.0, %v1748
    %1754 = vrot.lane.b32.xlu0 %v1743, 120
    %v1755 = vpop.permute.xlu0 %1754
    %1756 = vrot.lane.b32.xlu0 %v1745, 120
    %v1757 = vpop.permute.xlu0 %1756
    %1758 = vrot.lane.b32.xlu0 %v1747, 120
    %v1759 = vpop.permute.xlu0 %1758
    %1760 = vrot.lane.b32.xlu0 %v1749, 120
    %v1761 = vpop.permute.xlu0 %1760
    %v1766 = vmul.f32 %v1722, %v1755
    %v1767 = vmul.f32 %v1723, %v1757
    %v1768 = vmul.f32 %v1724, %v1759
    %v1769 = vmul.f32 %v1725, %v1761
    %v1770 = vsub.f32 1.0, %v1743
    %v1771 = vsub.f32 1.0, %v1745
    %v1772 = vsub.f32 1.0, %v1747
    %v1773 = vsub.f32 1.0, %v1749
    %1778 = vrot.lane.b32.xlu0 %v1770, 120
    %v1779 = vpop.permute.xlu0 %1778
    %1780 = vrot.lane.b32.xlu0 %v1771, 120
    %v1781 = vpop.permute.xlu0 %1780
    %1782 = vrot.lane.b32.xlu0 %v1772, 120
    %v1783 = vpop.permute.xlu0 %1782
    %1784 = vrot.lane.b32.xlu0 %v1773, 120
    %v1785 = vpop.permute.xlu0 %1784
    %v1790 = vmul.f32 %v1648, %v1779
    %v1791 = vmul.f32 %v1649, %v1781
    %v1792 = vmul.f32 %v1650, %v1783
    %v1793 = vmul.f32 %v1651, %v1785
    %v1794 = vadd.f32 %v1766, %v1790
    %v1795 = vadd.f32 %v1767, %v1791
    %v1796 = vadd.f32 %v1768, %v1792
    %v1797 = vadd.f32 %v1769, %v1793
    %v1798 = vpack.c.bf16 %v1795, %v1794
    %v1799 = vpack.c.bf16 %v1797, %v1796
    %s1800 = scalar_lea.vmem %s10, 8
    %v1801 = vld [vmem:[%s1800] sm:$0xf]
    %s1802 = scalar_lea.vmem %s11, 2
    %v1803 = vld [vmem:[%s1802] sm:$0x1]
    %v1805 = vlaneseq
    %v1806 = vshrl.u32 %v1805, 7
    %v1807 = vsub.s32 0, %v1806
    %v1808 = vrot.slane %v1803, %v1807
    %v1811 = vsel %vm427, %v1798, 0
    %v1814 = vsel %vm427, %v1799, 0
    %v1817 = vsel %vm1523, %v1801, 0
    %1819 = vmatprep.subr.bf16.mxu0 0
    %1820 = vmatpush1.bf16.msra.mxu0 0
    %1821 = vmatprep.subr.bf16.mxu0 0
    %1822 = vmatpush1.bf16.msra.mxu0 0
    %1823 = vmatprep.subr.bf16.mxu0 0
    %1824 = vmatpush1.bf16.msra.mxu0 0
    %1825 = vmatprep.subr.bf16.mxu0 0
    %1826 = vmatpush1.bf16.msra.mxu0 0
    %1827 = vmatprep.subr.bf16.mxu0 0
    %1828 = vmatpush1.bf16.msra.mxu0 0
    %1829 = vmatprep.subr.bf16.mxu0 0
    %1830 = vmatpush1.bf16.msra.mxu0 0
    %1831 = vmatprep.subr.bf16.mxu0 0
    %1832 = vmatpush1.bf16.msra.mxu0 0
    %1833 = vmatprep.subr.bf16.mxu0 0
    %1834 = vmatpush1.bf16.msra.mxu0 %v1817
    %1835 = vmatprep.subr.bf16.mxu0 0
    %1836 = vmatpush2.bf16.msra.mxu0 0
    %1837 = vmatprep.subr.bf16.mxu0 0
    %1838 = vmatpush2.bf16.msra.mxu0 0
    %1839 = vmatprep.subr.bf16.mxu0 0
    %1840 = vmatpush2.bf16.msra.mxu0 0
    %1841 = vmatprep.subr.bf16.mxu0 0
    %1842 = vmatpush2.bf16.msra.mxu0 0
    %1843 = vmatprep.subr.bf16.mxu0 0
    %1844 = vmatpush2.bf16.msra.mxu0 0
    %1845 = vmatprep.subr.bf16.mxu0 0
    %1846 = vmatpush2.bf16.msra.mxu0 0
    %1847 = vmatprep.subr.bf16.mxu0 0
    %1848 = vmatpush2.bf16.msra.mxu0 0
    %1849 = vmatprep.subr.bf16.mxu0 0
    %1850 = vmatpush2.bf16.msra.mxu0 0
    %1851 = vmatprep.mubr.bf16.mxu0 0
    %1852 = vmatmul.mubr.bf16.gmra.mxu0 %v1811
    %v1853 = vpop.f32.mrf.mxu0
    %v1854 = vadd.f32 %v1808, %v1853
    %v1855 = vpop.f32.mrf.mxu0
    %v1856 = vpop.f32.mrf.mxu0
    %v1857 = vadd.f32 %v1808, %v1856
    %v1858 = vpop.f32.mrf.mxu0
    %1859 = vmatprep.mubr.bf16.mxu0 0
    %1860 = vmatmul.mubr.bf16.gmra.mxu0 %v1814
    %v1861 = vpop.f32.mrf.mxu0
    %v1862 = vadd.f32 %v1808, %v1861
    %v1863 = vpop.f32.mrf.mxu0
    %v1864 = vpop.f32.mrf.mxu0
    %v1865 = vadd.f32 %v1808, %v1864
    %v1866 = vpop.f32.mrf.mxu0
    %1867 = vdwg.mxu0
    %v1868 = vmax.f32 %v1854, 0.0
    %v1869 = vmax.f32 %v1857, 0.0
    %v1870 = vmax.f32 %v1862, 0.0
    %v1871 = vmax.f32 %v1865, 0.0
    %v1872 = vxor.u32 %v1854, 2147483648
    %v1873 = vxor.u32 %v1857, 2147483648
    %v1874 = vxor.u32 %v1862, 2147483648
    %v1875 = vxor.u32 %v1865, 2147483648
    %v1876 = vmul.f32 %v1872, 1.442695
    %v1877 = vpow.pop %v1876
    %v1878 = vmul.f32 %v1873, 1.442695
    %v1879 = vpow.pop %v1878
    %v1880 = vmul.f32 %v1874, 1.442695
    %v1881 = vpow.pop %v1880
    %v1882 = vmul.f32 %v1875, 1.442695
    %v1883 = vpow.pop %v1882
    %v1884 = vadd.f32 %v1877, 1.0
    %v1885 = vadd.f32 %v1879, 1.0
    %v1886 = vadd.f32 %v1881, 1.0
    %v1887 = vadd.f32 %v1883, 1.0
    %v1888 = vrcp.pop %v1884
    %v1889 = vmul.f32 1.0, %v1888
    %v1890 = vrcp.pop %v1885
    %v1891 = vmul.f32 1.0, %v1890
    %v1892 = vrcp.pop %v1886
    %v1893 = vmul.f32 1.0, %v1892
    %v1894 = vrcp.pop %v1887
    %v1895 = vmul.f32 1.0, %v1894
    %1900 = vrot.lane.b32.xlu0 %v1889, 120
    %v1901 = vpop.permute.xlu0 %1900
    %1902 = vrot.lane.b32.xlu0 %v1891, 120
    %v1903 = vpop.permute.xlu0 %1902
    %1904 = vrot.lane.b32.xlu0 %v1893, 120
    %v1905 = vpop.permute.xlu0 %1904
    %1906 = vrot.lane.b32.xlu0 %v1895, 120
    %v1907 = vpop.permute.xlu0 %1906
    %v1912 = vmul.f32 %v1868, %v1901
    %v1913 = vmul.f32 %v1869, %v1903
    %v1914 = vmul.f32 %v1870, %v1905
    %v1915 = vmul.f32 %v1871, %v1907
    %v1916 = vsub.f32 1.0, %v1889
    %v1917 = vsub.f32 1.0, %v1891
    %v1918 = vsub.f32 1.0, %v1893
    %v1919 = vsub.f32 1.0, %v1895
    %1924 = vrot.lane.b32.xlu0 %v1916, 120
    %v1925 = vpop.permute.xlu0 %1924
    %1926 = vrot.lane.b32.xlu0 %v1917, 120
    %v1927 = vpop.permute.xlu0 %1926
    %1928 = vrot.lane.b32.xlu0 %v1918, 120
    %v1929 = vpop.permute.xlu0 %1928
    %1930 = vrot.lane.b32.xlu0 %v1919, 120
    %v1931 = vpop.permute.xlu0 %1930
    %v1936 = vmul.f32 %v1794, %v1925
    %v1937 = vmul.f32 %v1795, %v1927
    %v1938 = vmul.f32 %v1796, %v1929
    %v1939 = vmul.f32 %v1797, %v1931
    %v1940 = vadd.f32 %v1912, %v1936
    %v1941 = vadd.f32 %v1913, %v1937
    %v1942 = vadd.f32 %v1914, %v1938
    %v1943 = vadd.f32 %v1915, %v1939
    %v1944 = vpack.c.bf16 %v1941, %v1940
    %v1945 = vpack.c.bf16 %v1943, %v1942
    %s1946 = scalar_lea.vmem %s10, 12
    %v1947 = vld [vmem:[%s1946] sm:$0xf]
    %s1948 = scalar_lea.vmem %s11, 3
    %v1949 = vld [vmem:[%s1948] sm:$0x1]
    %v1951 = vlaneseq
    %v1952 = vshrl.u32 %v1951, 7
    %v1953 = vsub.s32 0, %v1952
    %v1954 = vrot.slane %v1949, %v1953
    %v1957 = vsel %vm427, %v1944, 0
    %v1960 = vsel %vm427, %v1945, 0
    %v1963 = vsel %vm1523, %v1947, 0
    %1965 = vmatprep.subr.bf16.mxu0 0
    %1966 = vmatpush1.bf16.msra.mxu0 0
    %1967 = vmatprep.subr.bf16.mxu0 0
    %1968 = vmatpush1.bf16.msra.mxu0 0
    %1969 = vmatprep.subr.bf16.mxu0 0
    %1970 = vmatpush1.bf16.msra.mxu0 0
    %1971 = vmatprep.subr.bf16.mxu0 0
    %1972 = vmatpush1.bf16.msra.mxu0 0
    %1973 = vmatprep.subr.bf16.mxu0 0
    %1974 = vmatpush1.bf16.msra.mxu0 0
    %1975 = vmatprep.subr.bf16.mxu0 0
    %1976 = vmatpush1.bf16.msra.mxu0 0
    %1977 = vmatprep.subr.bf16.mxu0 0
    %1978 = vmatpush1.bf16.msra.mxu0 0
    %1979 = vmatprep.subr.bf16.mxu0 0
    %1980 = vmatpush1.bf16.msra.mxu0 %v1963
    %1981 = vmatprep.subr.bf16.mxu0 0
    %1982 = vmatpush2.bf16.msra.mxu0 0
    %1983 = vmatprep.subr.bf16.mxu0 0
    %1984 = vmatpush2.bf16.msra.mxu0 0
    %1985 = vmatprep.subr.bf16.mxu0 0
    %1986 = vmatpush2.bf16.msra.mxu0 0
    %1987 = vmatprep.subr.bf16.mxu0 0
    %1988 = vmatpush2.bf16.msra.mxu0 0
    %1989 = vmatprep.subr.bf16.mxu0 0
    %1990 = vmatpush2.bf16.msra.mxu0 0
    %1991 = vmatprep.subr.bf16.mxu0 0
    %1992 = vmatpush2.bf16.msra.mxu0 0
    %1993 = vmatprep.subr.bf16.mxu0 0
    %1994 = vmatpush2.bf16.msra.mxu0 0
    %1995 = vmatprep.subr.bf16.mxu0 0
    %1996 = vmatpush2.bf16.msra.mxu0 0
    %1997 = vmatprep.mubr.bf16.mxu0 0
    %1998 = vmatmul.mubr.bf16.gmra.mxu0 %v1957
    %v1999 = vpop.f32.mrf.mxu0
    %v2000 = vadd.f32 %v1954, %v1999
    %v2001 = vpop.f32.mrf.mxu0
    %v2002 = vpop.f32.mrf.mxu0
    %v2003 = vadd.f32 %v1954, %v2002
    %v2004 = vpop.f32.mrf.mxu0
    %2005 = vmatprep.mubr.bf16.mxu0 0
    %2006 = vmatmul.mubr.bf16.gmra.mxu0 %v1960
    %v2007 = vpop.f32.mrf.mxu0
    %v2008 = vadd.f32 %v1954, %v2007
    %v2009 = vpop.f32.mrf.mxu0
    %v2010 = vpop.f32.mrf.mxu0
    %v2011 = vadd.f32 %v1954, %v2010
    %v2012 = vpop.f32.mrf.mxu0
    %2013 = vdwg.mxu0
    %v2014 = vmax.f32 %v2000, 0.0
    %v2015 = vmax.f32 %v2003, 0.0
    %v2016 = vmax.f32 %v2008, 0.0
    %v2017 = vmax.f32 %v2011, 0.0
    %v2018 = vxor.u32 %v2000, 2147483648
    %v2019 = vxor.u32 %v2003, 2147483648
    %v2020 = vxor.u32 %v2008, 2147483648
    %v2021 = vxor.u32 %v2011, 2147483648
    %v2022 = vmul.f32 %v2018, 1.442695
    %v2023 = vpow.pop %v2022
    %v2024 = vmul.f32 %v2019, 1.442695
    %v2025 = vpow.pop %v2024
    %v2026 = vmul.f32 %v2020, 1.442695
    %v2027 = vpow.pop %v2026
    %v2028 = vmul.f32 %v2021, 1.442695
    %v2029 = vpow.pop %v2028
    %v2030 = vadd.f32 %v2023, 1.0
    %v2031 = vadd.f32 %v2025, 1.0
    %v2032 = vadd.f32 %v2027, 1.0
    %v2033 = vadd.f32 %v2029, 1.0
    %v2034 = vrcp.pop %v2030
    %v2035 = vmul.f32 1.0, %v2034
    %v2036 = vrcp.pop %v2031
    %v2037 = vmul.f32 1.0, %v2036
    %v2038 = vrcp.pop %v2032
    %v2039 = vmul.f32 1.0, %v2038
    %v2040 = vrcp.pop %v2033
    %v2041 = vmul.f32 1.0, %v2040
    %2046 = vrot.lane.b32.xlu0 %v2035, 120
    %v2047 = vpop.permute.xlu0 %2046
    %2048 = vrot.lane.b32.xlu0 %v2037, 120
    %v2049 = vpop.permute.xlu0 %2048
    %2050 = vrot.lane.b32.xlu0 %v2039, 120
    %v2051 = vpop.permute.xlu0 %2050
    %2052 = vrot.lane.b32.xlu0 %v2041, 120
    %v2053 = vpop.permute.xlu0 %2052
    %v2058 = vmul.f32 %v2014, %v2047
    %v2059 = vmul.f32 %v2015, %v2049
    %v2060 = vmul.f32 %v2016, %v2051
    %v2061 = vmul.f32 %v2017, %v2053
    %v2062 = vsub.f32 1.0, %v2035
    %v2063 = vsub.f32 1.0, %v2037
    %v2064 = vsub.f32 1.0, %v2039
    %v2065 = vsub.f32 1.0, %v2041
    %2070 = vrot.lane.b32.xlu0 %v2062, 120
    %v2071 = vpop.permute.xlu0 %2070
    %2072 = vrot.lane.b32.xlu0 %v2063, 120
    %v2073 = vpop.permute.xlu0 %2072
    %2074 = vrot.lane.b32.xlu0 %v2064, 120
    %v2075 = vpop.permute.xlu0 %2074
    %2076 = vrot.lane.b32.xlu0 %v2065, 120
    %v2077 = vpop.permute.xlu0 %2076
    %v2082 = vmul.f32 %v1940, %v2071
    %v2083 = vmul.f32 %v1941, %v2073
    %v2084 = vmul.f32 %v1942, %v2075
    %v2085 = vmul.f32 %v1943, %v2077
    %v2086 = vadd.f32 %v2058, %v2082
    %v2087 = vadd.f32 %v2059, %v2083
    %v2088 = vadd.f32 %v2060, %v2084
    %v2089 = vadd.f32 %v2061, %v2085
    %v2090 = vpack.c.bf16 %v2087, %v2086
    %v2091 = vpack.c.bf16 %v2089, %v2088
    %v2092 = vld [vmem:[%s12] sm:$0xf]
    %v2093 = vld [vmem:[%s13] sm:$0x1]
    %v2095 = vlaneseq
    %v2096 = vshrl.u32 %v2095, 7
    %v2097 = vsub.s32 0, %v2096
    %v2098 = vrot.slane %v2093, %v2097
    %v2101 = vsel %vm427, %v2090, 0
    %v2104 = vsel %vm427, %v2091, 0
    %v2107 = vsel %vm1523, %v2092, 0
    %2109 = vmatprep.subr.bf16.mxu0 0
    %2110 = vmatpush1.bf16.msra.mxu0 0
    %2111 = vmatprep.subr.bf16.mxu0 0
    %2112 = vmatpush1.bf16.msra.mxu0 0
    %2113 = vmatprep.subr.bf16.mxu0 0
    %2114 = vmatpush1.bf16.msra.mxu0 0
    %2115 = vmatprep.subr.bf16.mxu0 0
    %2116 = vmatpush1.bf16.msra.mxu0 0
    %2117 = vmatprep.subr.bf16.mxu0 0
    %2118 = vmatpush1.bf16.msra.mxu0 0
    %2119 = vmatprep.subr.bf16.mxu0 0
    %2120 = vmatpush1.bf16.msra.mxu0 0
    %2121 = vmatprep.subr.bf16.mxu0 0
    %2122 = vmatpush1.bf16.msra.mxu0 0
    %2123 = vmatprep.subr.bf16.mxu0 0
    %2124 = vmatpush1.bf16.msra.mxu0 %v2107
    %2125 = vmatprep.subr.bf16.mxu0 0
    %2126 = vmatpush2.bf16.msra.mxu0 0
    %2127 = vmatprep.subr.bf16.mxu0 0
    %2128 = vmatpush2.bf16.msra.mxu0 0
    %2129 = vmatprep.subr.bf16.mxu0 0
    %2130 = vmatpush2.bf16.msra.mxu0 0
    %2131 = vmatprep.subr.bf16.mxu0 0
    %2132 = vmatpush2.bf16.msra.mxu0 0
    %2133 = vmatprep.subr.bf16.mxu0 0
    %2134 = vmatpush2.bf16.msra.mxu0 0
    %2135 = vmatprep.subr.bf16.mxu0 0
    %2136 = vmatpush2.bf16.msra.mxu0 0
    %2137 = vmatprep.subr.bf16.mxu0 0
    %2138 = vmatpush2.bf16.msra.mxu0 0
    %2139 = vmatprep.subr.bf16.mxu0 0
    %2140 = vmatpush2.bf16.msra.mxu0 0
    %2141 = vmatprep.mubr.bf16.mxu0 0
    %2142 = vmatmul.mubr.bf16.gmra.mxu0 %v2101
    %v2143 = vpop.f32.mrf.mxu0
    %v2144 = vadd.f32 %v2098, %v2143
    %v2145 = vpop.f32.mrf.mxu0
    %v2146 = vpop.f32.mrf.mxu0
    %v2147 = vadd.f32 %v2098, %v2146
    %v2148 = vpop.f32.mrf.mxu0
    %2149 = vmatprep.mubr.bf16.mxu0 0
    %2150 = vmatmul.mubr.bf16.gmra.mxu0 %v2104
    %v2151 = vpop.f32.mrf.mxu0
    %v2152 = vadd.f32 %v2098, %v2151
    %v2153 = vpop.f32.mrf.mxu0
    %v2154 = vpop.f32.mrf.mxu0
    %v2155 = vadd.f32 %v2098, %v2154
    %v2156 = vpop.f32.mrf.mxu0
    %2157 = vdwg.mxu0
    %v2162 = vcombine.high %v2144, %v2144
    %v2164 = vunpack.c.l.s4 1983009808
    %v2165 = vunpack.c.0.s8 %v2164
    %v2166 = vlaneseq
    %v2167 = vshrl.u32 %v2166, 7
    %v2168 = vsub.s32 %v2165, %v2167
    %v2169 = vrot.slane %v2144, %v2168
    %v2171 = vunpack.c.l.s4 1983009808
    %v2172 = vunpack.c.0.s8 %v2171
    %v2173 = vlaneseq
    %v2174 = vshrl.u32 %v2173, 7
    %v2175 = vsub.s32 %v2172, %v2174
    %v2176 = vrot.slane %v2162, %v2175
    %v2177 = vcombine.high %v2169, %v2169
    %v2178 = vcombine.high %v2176, %v2176
    %v2179 = vcombine.high %v2147, %v2147
    %v2181 = vunpack.c.l.s4 1983009808
    %v2182 = vunpack.c.0.s8 %v2181
    %v2183 = vlaneseq
    %v2184 = vshrl.u32 %v2183, 7
    %v2185 = vsub.s32 %v2182, %v2184
    %v2186 = vrot.slane %v2147, %v2185
    %v2188 = vunpack.c.l.s4 1983009808
    %v2189 = vunpack.c.0.s8 %v2188
    %v2190 = vlaneseq
    %v2191 = vshrl.u32 %v2190, 7
    %v2192 = vsub.s32 %v2189, %v2191
    %v2193 = vrot.slane %v2179, %v2192
    %v2194 = vcombine.high %v2186, %v2186
    %v2195 = vcombine.high %v2193, %v2193
    %v2196 = vcombine.high %v2152, %v2152
    %v2198 = vunpack.c.l.s4 1983009808
    %v2199 = vunpack.c.0.s8 %v2198
    %v2200 = vlaneseq
    %v2201 = vshrl.u32 %v2200, 7
    %v2202 = vsub.s32 %v2199, %v2201
    %v2203 = vrot.slane %v2152, %v2202
    %v2205 = vunpack.c.l.s4 1983009808
    %v2206 = vunpack.c.0.s8 %v2205
    %v2207 = vlaneseq
    %v2208 = vshrl.u32 %v2207, 7
    %v2209 = vsub.s32 %v2206, %v2208
    %v2210 = vrot.slane %v2196, %v2209
    %v2211 = vcombine.high %v2203, %v2203
    %v2212 = vcombine.high %v2210, %v2210
    %v2213 = vcombine.high %v2155, %v2155
    %v2215 = vunpack.c.l.s4 1983009808
    %v2216 = vunpack.c.0.s8 %v2215
    %v2217 = vlaneseq
    %v2218 = vshrl.u32 %v2217, 7
    %v2219 = vsub.s32 %v2216, %v2218
    %v2220 = vrot.slane %v2155, %v2219
    %v2222 = vunpack.c.l.s4 1983009808
    %v2223 = vunpack.c.0.s8 %v2222
    %v2224 = vlaneseq
    %v2225 = vshrl.u32 %v2224, 7
    %v2226 = vsub.s32 %v2223, %v2225
    %v2227 = vrot.slane %v2213, %v2226
    %v2228 = vcombine.high %v2220, %v2220
    %v2229 = vcombine.high %v2227, %v2227
    %v2246 = vpack.c.bf16 %v2169, %v2169
    %v2247 = vpack.c.bf16 %v2177, %v2177
    %v2248 = vpack.c.bf16 %v2176, %v2176
    %v2249 = vpack.c.bf16 %v2178, %v2178
    %v2250 = vpack.c.bf16 %v2186, %v2186
    %v2251 = vpack.c.bf16 %v2194, %v2194
    %v2252 = vpack.c.bf16 %v2193, %v2193
    %v2253 = vpack.c.bf16 %v2195, %v2195
    %v2254 = vpack.c.bf16 %v2203, %v2203
    %v2255 = vpack.c.bf16 %v2211, %v2211
    %v2256 = vpack.c.bf16 %v2210, %v2210
    %v2257 = vpack.c.bf16 %v2212, %v2212
    %v2258 = vpack.c.bf16 %v2220, %v2220
    %v2259 = vpack.c.bf16 %v2228, %v2228
    %v2260 = vpack.c.bf16 %v2227, %v2227
    %v2261 = vpack.c.bf16 %v2229, %v2229
    %vm2262 = vcmask 385024
    %2263 = vst.msk [vmem:[#allocation2] sm:$0x1] %vm2262, %v2246
    %2264 = vst.msk [vmem:[#allocation2 + $0x1] sm:$0x1] %vm2262, %v2247
    %2265 = vst.msk [vmem:[#allocation2 + $0x2] sm:$0x1] %vm2262, %v2248
    %2266 = vst.msk [vmem:[#allocation2 + $0x3] sm:$0x1] %vm2262, %v2249
    %2267 = vst.msk [vmem:[#allocation2 + $0x4] sm:$0x1] %vm2262, %v2250
    %2268 = vst.msk [vmem:[#allocation2 + $0x5] sm:$0x1] %vm2262, %v2251
    %2269 = vst.msk [vmem:[#allocation2 + $0x6] sm:$0x1] %vm2262, %v2252
    %2270 = vst.msk [vmem:[#allocation2 + $0x7] sm:$0x1] %vm2262, %v2253
    %2271 = vst.msk [vmem:[#allocation2 + $0x8] sm:$0x1] %vm2262, %v2254
    %2272 = vst.msk [vmem:[#allocation2 + $0x9] sm:$0x1] %vm2262, %v2255
    %2273 = vst.msk [vmem:[#allocation2 + $0xa] sm:$0x1] %vm2262, %v2256
    %2274 = vst.msk [vmem:[#allocation2 + $0xb] sm:$0x1] %vm2262, %v2257
    %2275 = vst.msk [vmem:[#allocation2 + $0xc] sm:$0x1] %vm2262, %v2258
    %2276 = vst.msk [vmem:[#allocation2 + $0xd] sm:$0x1] %vm2262, %v2259
    %2277 = vst.msk [vmem:[#allocation2 + $0xe] sm:$0x1] %vm2262, %v2260
    %2278 = vst.msk [vmem:[#allocation2 + $0xf] sm:$0x1] %vm2262, %v2261
    %v2296 = vunpack.c.l.s4 1966171168
    %v2297 = vunpack.c.0.s8 %v2296
    %v2298 = vlaneseq
    %v2299 = vshrl.u32 %v2298, 7
    %v2300 = vsub.s32 %v2297, %v2299
    %v2301 = vrot.slane %v2246, %v2300
    %v2303 = vunpack.c.l.s4 1966171168
    %v2304 = vunpack.c.0.s8 %v2303
    %v2305 = vlaneseq
    %v2306 = vshrl.u32 %v2305, 7
    %v2307 = vsub.s32 %v2304, %v2306
    %v2308 = vrot.slane %v2301, %v2307
    %v2310 = vunpack.c.l.s4 1966171168
    %v2311 = vunpack.c.0.s8 %v2310
    %v2312 = vlaneseq
    %v2313 = vshrl.u32 %v2312, 7
    %v2314 = vsub.s32 %v2311, %v2313
    %v2315 = vrot.slane %v2247, %v2314
    %v2317 = vunpack.c.l.s4 1966171168
    %v2318 = vunpack.c.0.s8 %v2317
    %v2319 = vlaneseq
    %v2320 = vshrl.u32 %v2319, 7
    %v2321 = vsub.s32 %v2318, %v2320
    %v2322 = vrot.slane %v2315, %v2321
    %v2324 = vunpack.c.l.s4 1966171168
    %v2325 = vunpack.c.0.s8 %v2324
    %v2326 = vlaneseq
    %v2327 = vshrl.u32 %v2326, 7
    %v2328 = vsub.s32 %v2325, %v2327
    %v2329 = vrot.slane %v2248, %v2328
    %v2331 = vunpack.c.l.s4 1966171168
    %v2332 = vunpack.c.0.s8 %v2331
    %v2333 = vlaneseq
    %v2334 = vshrl.u32 %v2333, 7
    %v2335 = vsub.s32 %v2332, %v2334
    %v2336 = vrot.slane %v2329, %v2335
    %v2338 = vunpack.c.l.s4 1966171168
    %v2339 = vunpack.c.0.s8 %v2338
    %v2340 = vlaneseq
    %v2341 = vshrl.u32 %v2340, 7
    %v2342 = vsub.s32 %v2339, %v2341
    %v2343 = vrot.slane %v2249, %v2342
    %v2345 = vunpack.c.l.s4 1966171168
    %v2346 = vunpack.c.0.s8 %v2345
    %v2347 = vlaneseq
    %v2348 = vshrl.u32 %v2347, 7
    %v2349 = vsub.s32 %v2346, %v2348
    %v2350 = vrot.slane %v2343, %v2349
    %v2352 = vunpack.c.l.s4 1966171168
    %v2353 = vunpack.c.0.s8 %v2352
    %v2354 = vlaneseq
    %v2355 = vshrl.u32 %v2354, 7
    %v2356 = vsub.s32 %v2353, %v2355
    %v2357 = vrot.slane %v2250, %v2356
    %v2359 = vunpack.c.l.s4 1966171168
    %v2360 = vunpack.c.0.s8 %v2359
    %v2361 = vlaneseq
    %v2362 = vshrl.u32 %v2361, 7
    %v2363 = vsub.s32 %v2360, %v2362
    %v2364 = vrot.slane %v2357, %v2363
    %v2366 = vunpack.c.l.s4 1966171168
    %v2367 = vunpack.c.0.s8 %v2366
    %v2368 = vlaneseq
    %v2369 = vshrl.u32 %v2368, 7
    %v2370 = vsub.s32 %v2367, %v2369
    %v2371 = vrot.slane %v2251, %v2370
    %v2373 = vunpack.c.l.s4 1966171168
    %v2374 = vunpack.c.0.s8 %v2373
    %v2375 = vlaneseq
    %v2376 = vshrl.u32 %v2375, 7
    %v2377 = vsub.s32 %v2374, %v2376
    %v2378 = vrot.slane %v2371, %v2377
    %v2380 = vunpack.c.l.s4 1966171168
    %v2381 = vunpack.c.0.s8 %v2380
    %v2382 = vlaneseq
    %v2383 = vshrl.u32 %v2382, 7
    %v2384 = vsub.s32 %v2381, %v2383
    %v2385 = vrot.slane %v2252, %v2384
    %v2387 = vunpack.c.l.s4 1966171168
    %v2388 = vunpack.c.0.s8 %v2387
    %v2389 = vlaneseq
    %v2390 = vshrl.u32 %v2389, 7
    %v2391 = vsub.s32 %v2388, %v2390
    %v2392 = vrot.slane %v2385, %v2391
    %v2394 = vunpack.c.l.s4 1966171168
    %v2395 = vunpack.c.0.s8 %v2394
    %v2396 = vlaneseq
    %v2397 = vshrl.u32 %v2396, 7
    %v2398 = vsub.s32 %v2395, %v2397
    %v2399 = vrot.slane %v2253, %v2398
    %v2401 = vunpack.c.l.s4 1966171168
    %v2402 = vunpack.c.0.s8 %v2401
    %v2403 = vlaneseq
    %v2404 = vshrl.u32 %v2403, 7
    %v2405 = vsub.s32 %v2402, %v2404
    %v2406 = vrot.slane %v2399, %v2405
    %v2408 = vunpack.c.l.s4 1966171168
    %v2409 = vunpack.c.0.s8 %v2408
    %v2410 = vlaneseq
    %v2411 = vshrl.u32 %v2410, 7
    %v2412 = vsub.s32 %v2409, %v2411
    %v2413 = vrot.slane %v2254, %v2412
    %v2415 = vunpack.c.l.s4 1966171168
    %v2416 = vunpack.c.0.s8 %v2415
    %v2417 = vlaneseq
    %v2418 = vshrl.u32 %v2417, 7
    %v2419 = vsub.s32 %v2416, %v2418
    %v2420 = vrot.slane %v2413, %v2419
    %v2422 = vunpack.c.l.s4 1966171168
    %v2423 = vunpack.c.0.s8 %v2422
    %v2424 = vlaneseq
    %v2425 = vshrl.u32 %v2424, 7
    %v2426 = vsub.s32 %v2423, %v2425
    %v2427 = vrot.slane %v2255, %v2426
    %v2429 = vunpack.c.l.s4 1966171168
    %v2430 = vunpack.c.0.s8 %v2429
    %v2431 = vlaneseq
    %v2432 = vshrl.u32 %v2431, 7
    %v2433 = vsub.s32 %v2430, %v2432
    %v2434 = vrot.slane %v2427, %v2433
    %v2436 = vunpack.c.l.s4 1966171168
    %v2437 = vunpack.c.0.s8 %v2436
    %v2438 = vlaneseq
    %v2439 = vshrl.u32 %v2438, 7
    %v2440 = vsub.s32 %v2437, %v2439
    %v2441 = vrot.slane %v2256, %v2440
    %v2443 = vunpack.c.l.s4 1966171168
    %v2444 = vunpack.c.0.s8 %v2443
    %v2445 = vlaneseq
    %v2446 = vshrl.u32 %v2445, 7
    %v2447 = vsub.s32 %v2444, %v2446
    %v2448 = vrot.slane %v2441, %v2447
    %v2450 = vunpack.c.l.s4 1966171168
    %v2451 = vunpack.c.0.s8 %v2450
    %v2452 = vlaneseq
    %v2453 = vshrl.u32 %v2452, 7
    %v2454 = vsub.s32 %v2451, %v2453
    %v2455 = vrot.slane %v2257, %v2454
    %v2457 = vunpack.c.l.s4 1966171168
    %v2458 = vunpack.c.0.s8 %v2457
    %v2459 = vlaneseq
    %v2460 = vshrl.u32 %v2459, 7
    %v2461 = vsub.s32 %v2458, %v2460
    %v2462 = vrot.slane %v2455, %v2461
    %v2464 = vunpack.c.l.s4 1966171168
    %v2465 = vunpack.c.0.s8 %v2464
    %v2466 = vlaneseq
    %v2467 = vshrl.u32 %v2466, 7
    %v2468 = vsub.s32 %v2465, %v2467
    %v2469 = vrot.slane %v2258, %v2468
    %v2471 = vunpack.c.l.s4 1966171168
    %v2472 = vunpack.c.0.s8 %v2471
    %v2473 = vlaneseq
    %v2474 = vshrl.u32 %v2473, 7
    %v2475 = vsub.s32 %v2472, %v2474
    %v2476 = vrot.slane %v2469, %v2475
    %v2478 = vunpack.c.l.s4 1966171168
    %v2479 = vunpack.c.0.s8 %v2478
    %v2480 = vlaneseq
    %v2481 = vshrl.u32 %v2480, 7
    %v2482 = vsub.s32 %v2479, %v2481
    %v2483 = vrot.slane %v2259, %v2482
    %v2485 = vunpack.c.l.s4 1966171168
    %v2486 = vunpack.c.0.s8 %v2485
    %v2487 = vlaneseq
    %v2488 = vshrl.u32 %v2487, 7
    %v2489 = vsub.s32 %v2486, %v2488
    %v2490 = vrot.slane %v2483, %v2489
    %v2492 = vunpack.c.l.s4 1966171168
    %v2493 = vunpack.c.0.s8 %v2492
    %v2494 = vlaneseq
    %v2495 = vshrl.u32 %v2494, 7
    %v2496 = vsub.s32 %v2493, %v2495
    %v2497 = vrot.slane %v2260, %v2496
    %v2499 = vunpack.c.l.s4 1966171168
    %v2500 = vunpack.c.0.s8 %v2499
    %v2501 = vlaneseq
    %v2502 = vshrl.u32 %v2501, 7
    %v2503 = vsub.s32 %v2500, %v2502
    %v2504 = vrot.slane %v2497, %v2503
    %v2506 = vunpack.c.l.s4 1966171168
    %v2507 = vunpack.c.0.s8 %v2506
    %v2508 = vlaneseq
    %v2509 = vshrl.u32 %v2508, 7
    %v2510 = vsub.s32 %v2507, %v2509
    %v2511 = vrot.slane %v2261, %v2510
    %v2513 = vunpack.c.l.s4 1966171168
    %v2514 = vunpack.c.0.s8 %v2513
    %v2515 = vlaneseq
    %v2516 = vshrl.u32 %v2515, 7
    %v2517 = vsub.s32 %v2514, %v2516
    %v2518 = vrot.slane %v2511, %v2517
    %2519 = vrot.lane.b32.xlu0 %v2308, 80
    %v2520 = vpop.permute.xlu0 %2519
    %2521 = vrot.lane.b32.xlu0 %v2322, 80
    %v2522 = vpop.permute.xlu0 %2521
    %2523 = vrot.lane.b32.xlu0 %v2336, 80
    %v2524 = vpop.permute.xlu0 %2523
    %2525 = vrot.lane.b32.xlu0 %v2350, 80
    %v2526 = vpop.permute.xlu0 %2525
    %2527 = vrot.lane.b32.xlu0 %v2364, 80
    %v2528 = vpop.permute.xlu0 %2527
    %2529 = vrot.lane.b32.xlu0 %v2378, 80
    %v2530 = vpop.permute.xlu0 %2529
    %2531 = vrot.lane.b32.xlu0 %v2392, 80
    %v2532 = vpop.permute.xlu0 %2531
    %2533 = vrot.lane.b32.xlu0 %v2406, 80
    %v2534 = vpop.permute.xlu0 %2533
    %2535 = vrot.lane.b32.xlu0 %v2420, 80
    %v2536 = vpop.permute.xlu0 %2535
    %2537 = vrot.lane.b32.xlu0 %v2434, 80
    %v2538 = vpop.permute.xlu0 %2537
    %2539 = vrot.lane.b32.xlu0 %v2448, 80
    %v2540 = vpop.permute.xlu0 %2539
    %2541 = vrot.lane.b32.xlu0 %v2462, 80
    %v2542 = vpop.permute.xlu0 %2541
    %2543 = vrot.lane.b32.xlu0 %v2476, 80
    %v2544 = vpop.permute.xlu0 %2543
    %2545 = vrot.lane.b32.xlu0 %v2490, 80
    %v2546 = vpop.permute.xlu0 %2545
    %2547 = vrot.lane.b32.xlu0 %v2504, 80
    %v2548 = vpop.permute.xlu0 %2547
    %2549 = vrot.lane.b32.xlu0 %v2518, 80
    %v2550 = vpop.permute.xlu0 %2549
    %2567 = vst.msk [vmem:[#allocation4] sm:$0x1] %vm2262, %v2520
    %2568 = vst.msk [vmem:[#allocation4 + $0x1] sm:$0x1] %vm2262, %v2522
    %2569 = vst.msk [vmem:[#allocation4 + $0x2] sm:$0x1] %vm2262, %v2524
    %2570 = vst.msk [vmem:[#allocation4 + $0x3] sm:$0x1] %vm2262, %v2526
    %2571 = vst.msk [vmem:[#allocation4 + $0x4] sm:$0x1] %vm2262, %v2528
    %2572 = vst.msk [vmem:[#allocation4 + $0x5] sm:$0x1] %vm2262, %v2530
    %2573 = vst.msk [vmem:[#allocation4 + $0x6] sm:$0x1] %vm2262, %v2532
    %2574 = vst.msk [vmem:[#allocation4 + $0x7] sm:$0x1] %vm2262, %v2534
    %2575 = vst.msk [vmem:[#allocation4 + $0x8] sm:$0x1] %vm2262, %v2536
    %2576 = vst.msk [vmem:[#allocation4 + $0x9] sm:$0x1] %vm2262, %v2538
    %2577 = vst.msk [vmem:[#allocation4 + $0xa] sm:$0x1] %vm2262, %v2540
    %2578 = vst.msk [vmem:[#allocation4 + $0xb] sm:$0x1] %vm2262, %v2542
    %2579 = vst.msk [vmem:[#allocation4 + $0xc] sm:$0x1] %vm2262, %v2544
    %2580 = vst.msk [vmem:[#allocation4 + $0xd] sm:$0x1] %vm2262, %v2546
    %2581 = vst.msk [vmem:[#allocation4 + $0xe] sm:$0x1] %vm2262, %v2548
    %2582 = vst.msk [vmem:[#allocation4 + $0xf] sm:$0x1] %vm2262, %v2550
    // Predicated region
    $region58: #{tpu_custom_call.1} parent=1 // pred_check
      _
    $region59: #{tpu_custom_call.1} parent=1 // pred_check_branch
      %2584 = sbr.rel (0) target = $region61
    $region60: #{tpu_custom_call.1} parent=1 // pred_region
      %s2586 = ssub.s32 256, 256
      %2587 = vsyncadd [#allocation3], %s2586
      %s2588 = sshll.u32 [#allocation2], 4
      %s2589 = int_to_ptr.vmem [resolvable:$true] %s2588
      %2594 = dma.vmem_to_hbm [thread:$0]  %s2589, 256, %s14, [#allocation3], 16, 16, 1
    $region61: #{tpu_custom_call.1} parent=1 // pred_fallthru
      _
    // Predicated region
    $region62: #{tpu_custom_call.1} parent=1 // pred_check
      _
    $region63: #{tpu_custom_call.1} parent=1 // pred_check_branch
      %2596 = sbr.rel (0) target = $region65
    $region64: #{tpu_custom_call.1} parent=1 // pred_region
      %s2598 = ssub.s32 256, 256
      %2599 = vsyncadd [#allocation5], %s2598
      %s2600 = sshll.u32 [#allocation4], 4
      %s2601 = int_to_ptr.vmem [resolvable:$true] %s2600
      %2606 = dma.vmem_to_hbm [thread:$0]  %s2601, 256, %s15, [#allocation5], 16, 16, 1
    $region65: #{tpu_custom_call.1} parent=1 // pred_fallthru
      _
    // Predicated region
    $region66: #{tpu_custom_call.1} parent=1 // pred_check
      _
    $region67: #{tpu_custom_call.1} parent=1 // pred_check_branch
      %2608 = sbr.rel (0) target = $region69
    $region68: #{tpu_custom_call.1} parent=1 // pred_region
      %2609 = dma.done [#allocation3], 256
    $region69: #{tpu_custom_call.1} parent=1 // pred_fallthru
      _
    // Predicated region
    $region70: #{tpu_custom_call.1} parent=1 // pred_check
      _
    $region71: #{tpu_custom_call.1} parent=1 // pred_check_branch
      %2611 = sbr.rel (0) target = $region73
    $region72: #{tpu_custom_call.1} parent=1 // pred_region
      %2612 = dma.done [#allocation5], 256
    $region73: #{tpu_custom_call.1} parent=1 // pred_fallthru
      _
    %2613 = vsyncpa [#allocation3], 1
    %2614 = vsyncpa [#allocation5], 1

</llo_original>
